<compile_context>
chip_gen: v7x
topology: tpu7x:2x2x1
jax: 0.10.0
libtpu: 0.0.40
codegen_flags: <defaults>
</compile_context>

<pallas_src>
import jax
import jax.numpy as jnp
from jax import lax
from jax.experimental import pallas as pl
from jax.experimental.pallas import tpu as pltpu

LANE = 128
_F32_MAX = float(jnp.finfo(jnp.float32).max)


# ----------------------------- in-kernel helpers -----------------------------

def _leaky_relu(x, slope=0.2):
    # F.leaky_relu(..., negative_slope=0.2) as used by the module.
    return jnp.where(x >= 0, x, slope * x)


def _nan_to_num(x):
    # torch.nan_to_num(nan=0.0): nan -> 0, +/-inf -> f32 max/min
    x = jnp.where(jnp.isnan(x), 0.0, x)
    return jnp.clip(x, -_F32_MAX, _F32_MAX)


def _l2_normalize_rows(x, eps=1e-12):
    # y / max(||y||, eps) expressed with an EUP rsqrt instead of sqrt + divide
    ss = jnp.sum(x * x, axis=-1, keepdims=True)
    return x * lax.rsqrt(jnp.maximum(ss, eps * eps))


# --------------------------------- kernels -----------------------------------

def feature_kernel(x_ref, w_in_ref, b_in_ref, bn1s_ref, bn1b_ref,
                   wl1_ref, wr1_ref, bl1_ref, ws_ref, bs_ref,
                   q1_ref, r1_ref, skip_ref):
    x = _nan_to_num(x_ref[...])
    h = jnp.dot(x, w_in_ref[...], preferred_element_type=jnp.float32) + b_in_ref[...]
    h = _leaky_relu(h)
    h = h * bn1s_ref[...] + bn1b_ref[...]          # eval-mode BatchNorm1d (folded)
    # Reassociated SAGEConv-1 operands (bias lives in the per-row root term).
    # Stored as bf16: they feed the bf16 MXU aggregation and halve HBM traffic.
    q1_ref[...] = jnp.dot(h, wl1_ref[...],
                          preferred_element_type=jnp.float32).astype(q1_ref.dtype)
    r1_ref[...] = (jnp.dot(h, wr1_ref[...], preferred_element_type=jnp.float32)
                   + bl1_ref[...]).astype(r1_ref.dtype)
    skip_ref[...] = (jnp.dot(h, ws_ref[...], preferred_element_type=jnp.float32)
                     + bs_ref[...]).astype(skip_ref.dtype)


def make_conv1_kernel(tile, q_resident):
    def conv1_kernel(adj_ref, q1_ref, r1_ref, invdeg_ref, wl2_ref, wr2_ref, bl2_ref,
                     p2_ref, r2_ref, acc_ref):
        k = pl.program_id(1)

        @pl.when(k == 0)
        def _():
            acc_ref[...] = jnp.zeros_like(acc_ref)

        if q_resident:
            start = pl.multiple_of(k * tile, tile)
            q_blk = q1_ref[pl.ds(start, tile), :]       # VMEM-resident q1
        else:
            q_blk = q1_ref[...]                          # streamed q1 tile
        # Native bf16 x bf16 MXU matmul, f32 accumulation.
        acc_ref[...] += jnp.dot(adj_ref[...], q_blk,
                                preferred_element_type=jnp.float32)

        @pl.when(k == pl.num_programs(1) - 1)
        def _():
            agg1 = acc_ref[...] * invdeg_ref[...]                    # mean aggregation
            c1 = _l2_normalize_rows(agg1 + r1_ref[...].astype(jnp.float32))
            c1 = _leaky_relu(c1)                                     # dropout = id (eval)
            # Layer-2 reassociation: adj @ (c1 @ Wl2) == (adj @ c1) @ Wl2
            p2_ref[...] = jnp.dot(c1, wl2_ref[...],
                                  preferred_element_type=jnp.float32).astype(p2_ref.dtype)
            r2_ref[...] = (jnp.dot(c1, wr2_ref[...], preferred_element_type=jnp.float32)
                           + bl2_ref[...]).astype(r2_ref.dtype)
    return conv1_kernel


def make_conv2_kernel(tile, p_resident):
    def conv2_kernel(adj_ref, p2_ref, r2_ref, skip_ref, invdeg_ref,
                     bn2s_ref, bn2b_ref, out_ref, acc_ref):
        k = pl.program_id(1)

        @pl.when(k == 0)
        def _():
            acc_ref[...] = jnp.zeros_like(acc_ref)

        if p_resident:
            start = pl.multiple_of(k * tile, tile)
            p_blk = p2_ref[pl.ds(start, tile), :]
        else:
            p_blk = p2_ref[...]
        acc_ref[...] += jnp.dot(adj_ref[...], p_blk,
                                preferred_element_type=jnp.float32)

        @pl.when(k == pl.num_programs(1) - 1)
        def _():
            agg2 = acc_ref[...] * invdeg_ref[...]
            c2 = _l2_normalize_rows(agg2 + r2_ref[...].astype(jnp.float32))
            y = c2 + skip_ref[...].astype(jnp.float32)               # skip connection
            y = y * bn2s_ref[...] + bn2b_ref[...]                    # eval-mode BN2
            y = _nan_to_num(y)
            out_ref[...] = _l2_normalize_rows(y).astype(out_ref.dtype)  # F.normalize
    return conv2_kernel


# ------------------------------- host wrapper ---------------------------------

def _round_up(n, m):
    return ((n + m - 1) // m) * m


def _pad2(a, rows, cols):
    a = jnp.asarray(a, jnp.float32)
    return jnp.pad(a, ((0, rows - a.shape[0]), (0, cols - a.shape[1])))


def _row(v, width):
    v = jnp.asarray(v, jnp.float32).reshape(1, -1)
    return jnp.pad(v, ((0, 0), (0, width - v.shape[1])))


def make_params(key, in_dim, hidden_dim, out_dim):
    """Deterministic init mimicking the module's _initialize_weights (torch layout)."""
    ks = jax.random.split(key, 16)

    def kaiming(k, out_f, in_f):
        gain = (2.0 / (1.0 + 0.01 ** 2)) ** 0.5
        std = gain / (in_f ** 0.5)
        return std * jax.random.normal(k, (out_f, in_f), jnp.float32)

    p = {}
    p["w_in"] = kaiming(ks[0], hidden_dim, in_dim)
    p["b_in"] = jnp.zeros((hidden_dim,), jnp.float32)
    p["wl1"] = kaiming(ks[1], hidden_dim, hidden_dim)   # conv1.lin_l
    p["bl1"] = jnp.zeros((hidden_dim,), jnp.float32)
    p["wr1"] = kaiming(ks[2], hidden_dim, hidden_dim)   # conv1.lin_r (no bias)
    p["wl2"] = kaiming(ks[3], out_dim, hidden_dim)      # conv2.lin_l
    p["bl2"] = jnp.zeros((out_dim,), jnp.float32)
    p["wr2"] = kaiming(ks[4], out_dim, hidden_dim)      # conv2.lin_r (no bias)
    p["ws"] = kaiming(ks[5], out_dim, hidden_dim)       # skip_transform
    p["bs"] = jnp.zeros((out_dim,), jnp.float32)
    p["bn1_gamma"] = 0.01 * jax.random.normal(ks[6], (hidden_dim,), jnp.float32)
    p["bn1_beta"] = jnp.zeros((hidden_dim,), jnp.float32)
    p["bn1_mean"] = jnp.zeros((hidden_dim,), jnp.float32)
    p["bn1_var"] = jnp.ones((hidden_dim,), jnp.float32)
    p["bn2_gamma"] = 0.01 * jax.random.normal(ks[7], (out_dim,), jnp.float32)
    p["bn2_beta"] = jnp.zeros((out_dim,), jnp.float32)
    p["bn2_mean"] = jnp.zeros((out_dim,), jnp.float32)
    p["bn2_var"] = jnp.ones((out_dim,), jnp.float32)
    return p


def improved_graphsage_forward(x, edge_index, params, out_dim, *,
                               tile=512,
                               resident_budget_bytes=24 * 1024 * 1024,
                               vmem_limit_bytes=48 * 1024 * 1024):
    N, in_dim = x.shape
    hid = params["w_in"].shape[0]
    x = x.astype(jnp.float32)

    Fp = _round_up(in_dim, LANE)
    Hp = _round_up(hid, LANE)
    Op = _round_up(out_dim, LANE)

    # Aggregation tile: multiple of 128, clamped so tiny graphs don't over-pad.
    tile = max(LANE, min(_round_up(tile, LANE), _round_up(N, LANE)))
    Np = _round_up(N, tile)
    n_m = n_k = Np // tile

    # ---- glue: bf16 edge-count adjacency (single scatter) + length-N degrees ----
    src, dst = edge_index[0], edge_index[1]
    adj = jnp.zeros((Np, Np), jnp.bfloat16).at[dst, src].add(
        jnp.ones(src.shape, jnp.bfloat16))                      # exact for counts <= 256
    deg = jnp.zeros((Np,), jnp.float32).at[dst].add(jnp.ones(dst.shape, jnp.float32))
    inv_deg = jnp.where(deg > 0, 1.0 / jnp.maximum(deg, 1.0), 0.0).reshape(Np, 1)

    # ---- glue: fold eval-mode BatchNorm into per-feature scale/shift ----
    bn_eps = 1e-5
    bn1_scale = params["bn1_gamma"] * lax.rsqrt(params["bn1_var"] + bn_eps)
    bn1_shift = params["bn1_beta"] - params["bn1_mean"] * bn1_scale
    bn2_scale = params["bn2_gamma"] * lax.rsqrt(params["bn2_var"] + bn_eps)
    bn2_shift = params["bn2_beta"] - params["bn2_mean"] * bn2_scale

    # ---- lane-pad everything to multiples of 128 (zeros keep math exact) ----
    xp = _pad2(x, Np, Fp)
    w_in = _pad2(params["w_in"].T, Fp, Hp)
    wl1 = _pad2(params["wl1"].T, Hp, Hp)
    wr1 = _pad2(params["wr1"].T, Hp, Hp)
    wl2 = _pad2(params["wl2"].T, Hp, Op)
    wr2 = _pad2(params["wr2"].T, Hp, Op)
    ws = _pad2(params["ws"].T, Hp, Op)
    b_in, bl1 = _row(params["b_in"], Hp), _row(params["bl1"], Hp)
    bl2, bs = _row(params["bl2"], Op), _row(params["bs"], Op)
    bn1s, bn1b = _row(bn1_scale, Hp), _row(bn1_shift, Hp)
    bn2s, bn2b = _row(bn2_scale, Op), _row(bn2_shift, Op)

    # VMEM residency of the projected-neighbor matrices (assume double buffers).
    q_resident = (2 * Np * Hp * 2) <= resident_budget_bytes
    p_resident = (2 * Np * Op * 2) <= resident_budget_bytes

    cp1 = pltpu.CompilerParams(dimension_semantics=("parallel",),
                               vmem_limit_bytes=vmem_limit_bytes)
    cp2 = pltpu.CompilerParams(dimension_semantics=("parallel", "arbitrary"),
                               vmem_limit_bytes=vmem_limit_bytes)

    # ---- Stage 1: per-node feature transform + SAGE operand projections ----
    q1, r1, skip = pl.pallas_call(
        feature_kernel,
        out_shape=(jax.ShapeDtypeStruct((Np, Hp), jnp.bfloat16),
                   jax.ShapeDtypeStruct((Np, Hp), jnp.bfloat16),
                   jax.ShapeDtypeStruct((Np, Op), jnp.bfloat16)),
        grid=(n_m,),
        in_specs=[pl.BlockSpec((tile, Fp), lambda i: (i, 0)),
                  pl.BlockSpec((Fp, Hp), lambda i: (0, 0)),
                  pl.BlockSpec((1, Hp), lambda i: (0, 0)),
                  pl.BlockSpec((1, Hp), lambda i: (0, 0)),
                  pl.BlockSpec((1, Hp), lambda i: (0, 0)),
                  pl.BlockSpec((Hp, Hp), lambda i: (0, 0)),
                  pl.BlockSpec((Hp, Hp), lambda i: (0, 0)),
                  pl.BlockSpec((1, Hp), lambda i: (0, 0)),
                  pl.BlockSpec((Hp, Op), lambda i: (0, 0)),
                  pl.BlockSpec((1, Op), lambda i: (0, 0))],
        out_specs=(pl.BlockSpec((tile, Hp), lambda i: (i, 0)),
                   pl.BlockSpec((tile, Hp), lambda i: (i, 0)),
                   pl.BlockSpec((tile, Op), lambda i: (i, 0))),
        compiler_params=cp1,
    )(xp, w_in, b_in, bn1s, bn1b, wl1, wr1, bl1, ws, bs)

    # ---- Stage 2: SAGEConv-1 aggregation (tiled K-reduction) + layer-2 proj ----
    q1_spec = (pl.BlockSpec((Np, Hp), lambda i, k: (0, 0)) if q_resident
               else pl.BlockSpec((tile, Hp), lambda i, k: (k, 0)))
    p2, r2 = pl.pallas_call(
        make_conv1_kernel(tile, q_resident),
        out_shape=(jax.ShapeDtypeStruct((Np, Op), jnp.bfloat16),
                   jax.ShapeDtypeStruct((Np, Op), jnp.bfloat16)),
        grid=(n_m, n_k),
        in_specs=[pl.BlockSpec((tile, tile), lambda i, k: (i, k)),   # adj (bf16)
                  q1_spec,                                           # q1 (resident/streamed)
                  pl.BlockSpec((tile, Hp), lambda i, k: (i, 0)),     # r1
                  pl.BlockSpec((tile, 1), lambda i, k: (i, 0)),      # 1/deg
                  pl.BlockSpec((Hp, Op), lambda i, k: (0, 0)),       # wl2 (resident)
                  pl.BlockSpec((Hp, Op), lambda i, k: (0, 0)),       # wr2 (resident)
                  pl.BlockSpec((1, Op), lambda i, k: (0, 0))],       # bl2 (resident)
        out_specs=(pl.BlockSpec((tile, Op), lambda i, k: (i, 0)),
                   pl.BlockSpec((tile, Op), lambda i, k: (i, 0))),
        scratch_shapes=[pltpu.VMEM((tile, Hp), jnp.float32)],
        compiler_params=cp2,
    )(adj, q1, r1, inv_deg, wl2, wr2, bl2)

    # ---- Stage 3: SAGEConv-2 aggregation + skip + BN2 + L2 normalize ----
    p2_spec = (pl.BlockSpec((Np, Op), lambda i, k: (0, 0)) if p_resident
               else pl.BlockSpec((tile, Op), lambda i, k: (k, 0)))
    out = pl.pallas_call(
        make_conv2_kernel(tile, p_resident),
        out_shape=jax.ShapeDtypeStruct((Np, Op), jnp.float32),
        grid=(n_m, n_k),
        in_specs=[pl.BlockSpec((tile, tile), lambda i, k: (i, k)),   # adj (bf16)
                  p2_spec,                                           # p2 (resident/streamed)
                  pl.BlockSpec((tile, Op), lambda i, k: (i, 0)),     # r2
                  pl.BlockSpec((tile, Op), lambda i, k: (i, 0)),     # skip
                  pl.BlockSpec((tile, 1), lambda i, k: (i, 0)),      # 1/deg
                  pl.BlockSpec((1, Op), lambda i, k: (0, 0)),        # bn2 scale
                  pl.BlockSpec((1, Op), lambda i, k: (0, 0))],       # bn2 shift
        out_specs=pl.BlockSpec((tile, Op), lambda i, k: (i, 0)),
        scratch_shapes=[pltpu.VMEM((tile, Op), jnp.float32)],
        compiler_params=cp2,
    )(adj, p2, r2, skip, inv_deg, bn2s, bn2b)

    return out[:N, :out_dim]


if __name__ == "__main__":
    in_dim, hidden_dim, out_dim = 16, 32, 16
    N, E = 32, 64

    key = jax.random.PRNGKey(0)
    k_x, k_src, k_dst, k_p = jax.random.split(key, 4)

    x = jax.random.normal(k_x, (N, in_dim), jnp.float32)
    edge_index = jnp.stack([
        jax.random.randint(k_src, (E,), 0, N),
        jax.random.randint(k_dst, (E,), 0, N),
    ], axis=0)  # (2, E): row 0 = src, row 1 = dst

    params = make_params(k_p, in_dim, hidden_dim, out_dim)

    out = improved_graphsage_forward(x, edge_index, params, out_dim)
    out = jax.block_until_ready(out)

    assert out.shape == (N, out_dim)
    assert bool(jnp.all(jnp.isfinite(out)))
    print("KERNEL_OK")
</pallas_src>

<mosaic_0001>
module attributes {stable_mosaic.version = 11 : i64} {
  func.func @feature_kernel(%arg0: i32, %arg1: memref<128x128xf32, #tpu.memory_space<vmem>>, %arg2: memref<128x128xf32, #tpu.memory_space<vmem>>, %arg3: memref<1x128xf32, #tpu.memory_space<vmem>>, %arg4: memref<1x128xf32, #tpu.memory_space<vmem>>, %arg5: memref<1x128xf32, #tpu.memory_space<vmem>>, %arg6: memref<128x128xf32, #tpu.memory_space<vmem>>, %arg7: memref<128x128xf32, #tpu.memory_space<vmem>>, %arg8: memref<1x128xf32, #tpu.memory_space<vmem>>, %arg9: memref<128x128xf32, #tpu.memory_space<vmem>>, %arg10: memref<1x128xf32, #tpu.memory_space<vmem>>, %arg11: memref<128x128xbf16, #tpu.memory_space<vmem>>, %arg12: memref<128x128xbf16, #tpu.memory_space<vmem>>, %arg13: memref<128x128xbf16, #tpu.memory_space<vmem>>) attributes {dimension_semantics = [#tpu.dimension_semantics<parallel>], iteration_bounds = array<i64: 1>, scalar_prefetch = 0 : i64, scratch_operands = 0 : i64, tpu.core_type = #tpu.core_type<tc>, window_params = [{transform_indices = @transform_0, window_bounds = array<i64: 128, 128>}, {pipeline_mode = #tpu.pipeline_mode<synchronous>, transform_indices = @transform_1, window_bounds = array<i64: 128, 128>}, {pipeline_mode = #tpu.pipeline_mode<synchronous>, transform_indices = @transform_2, window_bounds = array<i64: 1, 128>}, {pipeline_mode = #tpu.pipeline_mode<synchronous>, transform_indices = @transform_3, window_bounds = array<i64: 1, 128>}, {pipeline_mode = #tpu.pipeline_mode<synchronous>, transform_indices = @transform_4, window_bounds = array<i64: 1, 128>}, {pipeline_mode = #tpu.pipeline_mode<synchronous>, transform_indices = @transform_5, window_bounds = array<i64: 128, 128>}, {pipeline_mode = #tpu.pipeline_mode<synchronous>, transform_indices = @transform_6, window_bounds = array<i64: 128, 128>}, {pipeline_mode = #tpu.pipeline_mode<synchronous>, transform_indices = @transform_7, window_bounds = array<i64: 1, 128>}, {pipeline_mode = #tpu.pipeline_mode<synchronous>, transform_indices = @transform_8, window_bounds = array<i64: 128, 128>}, {pipeline_mode = #tpu.pipeline_mode<synchronous>, transform_indices = @transform_9, window_bounds = array<i64: 1, 128>}, {transform_indices = @transform_10, window_bounds = array<i64: 128, 128>}, {transform_indices = @transform_11, window_bounds = array<i64: 128, 128>}, {transform_indices = @transform_12, window_bounds = array<i64: 128, 128>}]} {
    %c0 = arith.constant 0 : index
    %c0_0 = arith.constant 0 : index
    %0 = vector.load %arg1[%c0, %c0_0] : memref<128x128xf32, #tpu.memory_space<vmem>>, vector<128x128xf32>
    %1 = arith.cmpf one, %0, %0 : vector<128x128xf32>
    %cst = arith.constant 0.000000e+00 : f32
    %2 = vector.broadcast %cst : f32 to vector<128x128xf32>
    %3 = arith.select %1, %2, %0 : vector<128x128xi1>, vector<128x128xf32>
    %cst_1 = arith.constant -3.40282347E+38 : f32
    %cst_2 = arith.constant 3.40282347E+38 : f32
    %4 = vector.broadcast %cst_1 : f32 to vector<128x128xf32>
    %5 = arith.maximumf %4, %3 : vector<128x128xf32>
    %6 = vector.broadcast %cst_2 : f32 to vector<128x128xf32>
    %7 = arith.minimumf %6, %5 : vector<128x128xf32>
    %c0_3 = arith.constant 0 : index
    %c0_4 = arith.constant 0 : index
    %8 = vector.load %arg2[%c0_3, %c0_4] : memref<128x128xf32, #tpu.memory_space<vmem>>, vector<128x128xf32>
    %cst_5 = arith.constant dense<0.000000e+00> : vector<128x128xf32>
    %9 = tpu.matmul %7, %8, %cst_5 {dimension_numbers = #tpu.dot_dimension_numbers<[1], [0], [0], [1], [0, 0, 1, 1], [], []>} : vector<128x128xf32>, vector<128x128xf32>, vector<128x128xf32> -> vector<128x128xf32>
    %c0_6 = arith.constant 0 : index
    %c0_7 = arith.constant 0 : index
    %10 = vector.load %arg3[%c0_6, %c0_7] : memref<1x128xf32, #tpu.memory_space<vmem>>, vector<1x128xf32>
    %11 = vector.broadcast %10 : vector<1x128xf32> to vector<128x128xf32>
    %12 = arith.addf %9, %11 : vector<128x128xf32>
    %cst_8 = arith.constant 0.000000e+00 : f32
    %13 = vector.broadcast %cst_8 : f32 to vector<128x128xf32>
    %14 = arith.cmpf oge, %12, %13 : vector<128x128xf32>
    %cst_9 = arith.constant 2.000000e-01 : f32
    %15 = vector.broadcast %cst_9 : f32 to vector<128x128xf32>
    %16 = arith.mulf %15, %12 : vector<128x128xf32>
    %17 = arith.select %14, %12, %16 : vector<128x128xi1>, vector<128x128xf32>
    %c0_10 = arith.constant 0 : index
    %c0_11 = arith.constant 0 : index
    %18 = vector.load %arg4[%c0_10, %c0_11] : memref<1x128xf32, #tpu.memory_space<vmem>>, vector<1x128xf32>
    %19 = vector.broadcast %18 : vector<1x128xf32> to vector<128x128xf32>
    %20 = arith.mulf %17, %19 : vector<128x128xf32>
    %c0_12 = arith.constant 0 : index
    %c0_13 = arith.constant 0 : index
    %21 = vector.load %arg5[%c0_12, %c0_13] : memref<1x128xf32, #tpu.memory_space<vmem>>, vector<1x128xf32>
    %22 = vector.broadcast %21 : vector<1x128xf32> to vector<128x128xf32>
    %23 = arith.addf %20, %22 : vector<128x128xf32>
    %c0_14 = arith.constant 0 : index
    %c0_15 = arith.constant 0 : index
    %24 = vector.load %arg6[%c0_14, %c0_15] : memref<128x128xf32, #tpu.memory_space<vmem>>, vector<128x128xf32>
    %cst_16 = arith.constant dense<0.000000e+00> : vector<128x128xf32>
    %25 = tpu.matmul %23, %24, %cst_16 {dimension_numbers = #tpu.dot_dimension_numbers<[1], [0], [0], [1], [0, 0, 1, 1], [], []>} : vector<128x128xf32>, vector<128x128xf32>, vector<128x128xf32> -> vector<128x128xf32>
    %26 = arith.truncf %25 : vector<128x128xf32> to vector<128x128xbf16>
    %c0_17 = arith.constant 0 : index
    %c0_18 = arith.constant 0 : index
    %27 = vector.load %arg11[%c0_17, %c0_18] : memref<128x128xbf16, #tpu.memory_space<vmem>>, vector<128x128xbf16>
    tpu.vector_store %arg11[%c0_17, %c0_18], %26 {strides = array<i32>} : memref<128x128xbf16, #tpu.memory_space<vmem>>, vector<128x128xbf16>,
    %c0_19 = arith.constant 0 : index
    %c0_20 = arith.constant 0 : index
    %28 = vector.load %arg7[%c0_19, %c0_20] : memref<128x128xf32, #tpu.memory_space<vmem>>, vector<128x128xf32>
    %cst_21 = arith.constant dense<0.000000e+00> : vector<128x128xf32>
    %29 = tpu.matmul %23, %28, %cst_21 {dimension_numbers = #tpu.dot_dimension_numbers<[1], [0], [0], [1], [0, 0, 1, 1], [], []>} : vector<128x128xf32>, vector<128x128xf32>, vector<128x128xf32> -> vector<128x128xf32>
    %c0_22 = arith.constant 0 : index
    %c0_23 = arith.constant 0 : index
    %30 = vector.load %arg8[%c0_22, %c0_23] : memref<1x128xf32, #tpu.memory_space<vmem>>, vector<1x128xf32>
    %31 = vector.broadcast %30 : vector<1x128xf32> to vector<128x128xf32>
    %32 = arith.addf %29, %31 : vector<128x128xf32>
    %33 = arith.truncf %32 : vector<128x128xf32> to vector<128x128xbf16>
    %c0_24 = arith.constant 0 : index
    %c0_25 = arith.constant 0 : index
    %34 = vector.load %arg12[%c0_24, %c0_25] : memref<128x128xbf16, #tpu.memory_space<vmem>>, vector<128x128xbf16>
    tpu.vector_store %arg12[%c0_24, %c0_25], %33 {strides = array<i32>} : memref<128x128xbf16, #tpu.memory_space<vmem>>, vector<128x128xbf16>,
    %c0_26 = arith.constant 0 : index
    %c0_27 = arith.constant 0 : index
    %35 = vector.load %arg9[%c0_26, %c0_27] : memref<128x128xf32, #tpu.memory_space<vmem>>, vector<128x128xf32>
    %cst_28 = arith.constant dense<0.000000e+00> : vector<128x128xf32>
    %36 = tpu.matmul %23, %35, %cst_28 {dimension_numbers = #tpu.dot_dimension_numbers<[1], [0], [0], [1], [0, 0, 1, 1], [], []>} : vector<128x128xf32>, vector<128x128xf32>, vector<128x128xf32> -> vector<128x128xf32>
    %c0_29 = arith.constant 0 : index
    %c0_30 = arith.constant 0 : index
    %37 = vector.load %arg10[%c0_29, %c0_30] : memref<1x128xf32, #tpu.memory_space<vmem>>, vector<1x128xf32>
    %38 = vector.broadcast %37 : vector<1x128xf32> to vector<128x128xf32>
    %39 = arith.addf %36, %38 : vector<128x128xf32>
    %40 = arith.truncf %39 : vector<128x128xf32> to vector<128x128xbf16>
    %c0_31 = arith.constant 0 : index
    %c0_32 = arith.constant 0 : index
    %41 = vector.load %arg13[%c0_31, %c0_32] : memref<128x128xbf16, #tpu.memory_space<vmem>>, vector<128x128xbf16>
    tpu.vector_store %arg13[%c0_31, %c0_32], %40 {strides = array<i32>} : memref<128x128xbf16, #tpu.memory_space<vmem>>, vector<128x128xbf16>,
    return
  }
  func.func @transform_0(%arg0: i32) -> (i32, i32) {
    %c0_i32 = arith.constant 0 : i32
    %c0_i32_0 = arith.constant 0 : i32
    return %arg0, %c0_i32 : i32, i32
  }
  func.func @transform_1(%arg0: i32) -> (i32, i32) {
    %c0_i32 = arith.constant 0 : i32
    %c0_i32_0 = arith.constant 0 : i32
    %c0_i32_1 = arith.constant 0 : i32
    return %c0_i32, %c0_i32_0 : i32, i32
  }
  func.func @transform_2(%arg0: i32) -> (i32, i32) {
    %c0_i32 = arith.constant 0 : i32
    %c0_i32_0 = arith.constant 0 : i32
    %c0_i32_1 = arith.constant 0 : i32
    return %c0_i32, %c0_i32_0 : i32, i32
  }
  func.func @transform_3(%arg0: i32) -> (i32, i32) {
    %c0_i32 = arith.constant 0 : i32
    %c0_i32_0 = arith.constant 0 : i32
    %c0_i32_1 = arith.constant 0 : i32
    return %c0_i32, %c0_i32_0 : i32, i32
  }
  func.func @transform_4(%arg0: i32) -> (i32, i32) {
    %c0_i32 = arith.constant 0 : i32
    %c0_i32_0 = arith.constant 0 : i32
    %c0_i32_1 = arith.constant 0 : i32
    return %c0_i32, %c0_i32_0 : i32, i32
  }
  func.func @transform_5(%arg0: i32) -> (i32, i32) {
    %c0_i32 = arith.constant 0 : i32
    %c0_i32_0 = arith.constant 0 : i32
    %c0_i32_1 = arith.constant 0 : i32
    return %c0_i32, %c0_i32_0 : i32, i32
  }
  func.func @transform_6(%arg0: i32) -> (i32, i32) {
    %c0_i32 = arith.constant 0 : i32
    %c0_i32_0 = arith.constant 0 : i32
    %c0_i32_1 = arith.constant 0 : i32
    return %c0_i32, %c0_i32_0 : i32, i32
  }
  func.func @transform_7(%arg0: i32) -> (i32, i32) {
    %c0_i32 = arith.constant 0 : i32
    %c0_i32_0 = arith.constant 0 : i32
    %c0_i32_1 = arith.constant 0 : i32
    return %c0_i32, %c0_i32_0 : i32, i32
  }
  func.func @transform_8(%arg0: i32) -> (i32, i32) {
    %c0_i32 = arith.constant 0 : i32
    %c0_i32_0 = arith.constant 0 : i32
    %c0_i32_1 = arith.constant 0 : i32
    return %c0_i32, %c0_i32_0 : i32, i32
  }
  func.func @transform_9(%arg0: i32) -> (i32, i32) {
    %c0_i32 = arith.constant 0 : i32
    %c0_i32_0 = arith.constant 0 : i32
    %c0_i32_1 = arith.constant 0 : i32
    return %c0_i32, %c0_i32_0 : i32, i32
  }
  func.func @transform_10(%arg0: i32) -> (i32, i32) {
    %c0_i32 = arith.constant 0 : i32
    %c0_i32_0 = arith.constant 0 : i32
    return %arg0, %c0_i32 : i32, i32
  }
  func.func @transform_11(%arg0: i32) -> (i32, i32) {
    %c0_i32 = arith.constant 0 : i32
    %c0_i32_0 = arith.constant 0 : i32
    return %arg0, %c0_i32 : i32, i32
  }
  func.func @transform_12(%arg0: i32) -> (i32, i32) {
    %c0_i32 = arith.constant 0 : i32
    %c0_i32_0 = arith.constant 0 : i32
    return %arg0, %c0_i32 : i32, i32
  }
}

</mosaic_0001>

<llo_original>
// kernel: tpu_custom_call.1
$region0: #{tpu_custom_call.1}
  #allocation0 [shape = 'u32[]', space=smem, size = 0x4, offset = 0x4, fixed_abs, tag = 'smem constant byte address 0x4 - core index']
  #allocation1 [shape = 'u32[144,128]{1,0:T(1,128)}', space=vmem, size = 0x12000, scoped, tag = 'internal scratch']
  %s0 = inlined_call_operand.hbm [shape: f32[128,128], index: 0, kind: input, shape index: {}]
  %s1 = inlined_call_operand.hbm [shape: f32[128,128], index: 1, kind: input, shape index: {}]
  %s2 = inlined_call_operand.vmem [shape: f32[1,128], index: 2, kind: input, shape index: {}]
  %s3 = inlined_call_operand.vmem [shape: f32[1,128], index: 3, kind: input, shape index: {}]
  %s4 = inlined_call_operand.vmem [shape: f32[1,128], index: 4, kind: input, shape index: {}]
  %s5 = inlined_call_operand.hbm [shape: f32[128,128], index: 5, kind: input, shape index: {}]
  %s6 = inlined_call_operand.hbm [shape: f32[128,128], index: 6, kind: input, shape index: {}]
  %s7 = inlined_call_operand.vmem [shape: f32[1,128], index: 7, kind: input, shape index: {}]
  %s8 = inlined_call_operand.hbm [shape: f32[128,128], index: 8, kind: input, shape index: {}]
  %s9 = inlined_call_operand.vmem [shape: f32[1,128], index: 9, kind: input, shape index: {}]
  %s10 = inlined_call_operand.hbm [shape: bf16[128,128], index: 10, kind: output, shape index: {0}]
  %s11 = inlined_call_operand.hbm [shape: bf16[128,128], index: 11, kind: output, shape index: {1}]
  %s12 = inlined_call_operand.hbm [shape: bf16[128,128], index: 12, kind: output, shape index: {2}]
  %13 = xla_tuple %s10, %s11, %s12
  %s14 = sld [smem:[#allocation0]]
  $region86: #{tpu_custom_call.1} parent=0
    _
  %s16 = ssub.s32 1, %s14
  %s17 = scalar_select 0, %s16, %s14
  $region1: #{tpu_custom_call.1} parent=0
    #allocation2 [shape = 'u8[65536]{0}', space=vmem, size = 0x10000, scoped, tag = 'input window, operand 0, single buffered']
    #allocation3 [shape = 's32[1]{0}', space=sflag, size = 0x4, scoped, tag = 'scoped memory for tpu_custom_call.1']
    #allocation4 [shape = 's32[1]{0}', space=sflag, size = 0x4, scoped, tag = 'scoped memory for tpu_custom_call.1']
    #allocation5 [shape = 'u8[65536]{0}', space=vmem, size = 0x10000, scoped, tag = 'input window, operand 1, single buffered']
    #allocation6 [shape = 's32[1]{0}', space=sflag, size = 0x4, scoped, tag = 'scoped memory for tpu_custom_call.1']
    #allocation7 [shape = 'u8[65536]{0}', space=vmem, size = 0x10000, scoped, tag = 'input window, operand 5, single buffered']
    #allocation8 [shape = 'u8[65536]{0}', space=vmem, size = 0x10000, scoped, tag = 'input window, operand 6, single buffered']
    #allocation9 [shape = 's32[1]{0}', space=sflag, size = 0x4, scoped, tag = 'scoped memory for tpu_custom_call.1']
    #allocation10 [shape = 'u8[65536]{0}', space=vmem, size = 0x10000, scoped, tag = 'input window, operand 8, single buffered']
    #allocation11 [shape = 'u8[32768]{0}', space=vmem, size = 0x8000, scoped, tag = 'output window, operand 0, single buffered']
    #allocation12 [shape = 'u8[32768]{0}', space=vmem, size = 0x8000, scoped, tag = 'output window, operand 1, single buffered']
    #allocation13 [shape = 's32[1]{0}', space=sflag, size = 0x4, scoped, tag = 'scoped memory for tpu_custom_call.1']
    #allocation14 [shape = 'u8[32768]{0}', space=vmem, size = 0x8000, scoped, tag = 'output window, operand 2, single buffered']
    %18 = vsyncpa [#allocation3], 0
    %19 = vsyncpa [#allocation6], 0
    %20 = vsyncpa [#allocation9], 0
    %21 = vsyncpa [#allocation4], 0
    %22 = vsyncpa [#allocation13], 0
    // Predicated region
    $region2: #{tpu_custom_call.1} parent=1 // pred_check
      _
    $region3: #{tpu_custom_call.1} parent=1 // pred_check_branch
      %24 = sbr.rel (0) target = $region5
    $region4: #{tpu_custom_call.1} parent=1 // pred_region
      %s26 = ssub.s32 2048, 2048
      %27 = vsyncadd [#allocation3], %s26
      %s28 = sshll.u32 [#allocation2], 4
      %s29 = int_to_ptr.vmem [resolvable:$true] %s28
      %34 = dma.hbm_to_vmem [thread:$0]  %s0, 2048, %s29, [#allocation3], 128, 128, 8
    $region5: #{tpu_custom_call.1} parent=1 // pred_fallthru
      _
    // Predicated region
    $region6: #{tpu_custom_call.1} parent=1 // pred_check
      _
    $region7: #{tpu_custom_call.1} parent=1 // pred_check_branch
      %36 = sbr.rel (0) target = $region9
    $region8: #{tpu_custom_call.1} parent=1 // pred_region
      %s38 = ssub.s32 2048, 2048
      %39 = vsyncadd [#allocation6], %s38
      %s40 = sshll.u32 [#allocation5], 4
      %s41 = int_to_ptr.vmem [resolvable:$true] %s40
      %46 = dma.hbm_to_vmem [thread:$0]  %s1, 2048, %s41, [#allocation6], 128, 128, 8
    $region9: #{tpu_custom_call.1} parent=1 // pred_fallthru
      _
    // Predicated region
    $region10: #{tpu_custom_call.1} parent=1 // pred_check
      _
    $region11: #{tpu_custom_call.1} parent=1 // pred_check_branch
      %48 = sbr.rel (0) target = $region13
    $region12: #{tpu_custom_call.1} parent=1 // pred_region
      _
    $region13: #{tpu_custom_call.1} parent=1 // pred_fallthru
      _
    // Predicated region
    $region14: #{tpu_custom_call.1} parent=1 // pred_check
      _
    $region15: #{tpu_custom_call.1} parent=1 // pred_check_branch
      %50 = sbr.rel (0) target = $region17
    $region16: #{tpu_custom_call.1} parent=1 // pred_region
      _
    $region17: #{tpu_custom_call.1} parent=1 // pred_fallthru
      _
    // Predicated region
    $region18: #{tpu_custom_call.1} parent=1 // pred_check
      _
    $region19: #{tpu_custom_call.1} parent=1 // pred_check_branch
      %52 = sbr.rel (0) target = $region21
    $region20: #{tpu_custom_call.1} parent=1 // pred_region
      _
    $region21: #{tpu_custom_call.1} parent=1 // pred_fallthru
      _
    // Predicated region
    $region22: #{tpu_custom_call.1} parent=1 // pred_check
      _
    $region23: #{tpu_custom_call.1} parent=1 // pred_check_branch
      %54 = sbr.rel (0) target = $region25
    $region24: #{tpu_custom_call.1} parent=1 // pred_region
      %s56 = ssub.s32 2048, 2048
      %57 = vsyncadd [#allocation6], %s56
      %s58 = sshll.u32 [#allocation7], 4
      %s59 = int_to_ptr.vmem [resolvable:$true] %s58
      %64 = dma.hbm_to_vmem [thread:$0]  %s5, 2048, %s59, [#allocation6], 128, 128, 8
    $region25: #{tpu_custom_call.1} parent=1 // pred_fallthru
      _
    // Predicated region
    $region26: #{tpu_custom_call.1} parent=1 // pred_check
      _
    $region27: #{tpu_custom_call.1} parent=1 // pred_check_branch
      %66 = sbr.rel (0) target = $region29
    $region28: #{tpu_custom_call.1} parent=1 // pred_region
      %s68 = ssub.s32 2048, 2048
      %69 = vsyncadd [#allocation9], %s68
      %s70 = sshll.u32 [#allocation8], 4
      %s71 = int_to_ptr.vmem [resolvable:$true] %s70
      %76 = dma.hbm_to_vmem [thread:$0]  %s6, 2048, %s71, [#allocation9], 128, 128, 8
    $region29: #{tpu_custom_call.1} parent=1 // pred_fallthru
      _
    // Predicated region
    $region30: #{tpu_custom_call.1} parent=1 // pred_check
      _
    $region31: #{tpu_custom_call.1} parent=1 // pred_check_branch
      %78 = sbr.rel (0) target = $region33
    $region32: #{tpu_custom_call.1} parent=1 // pred_region
      _
    $region33: #{tpu_custom_call.1} parent=1 // pred_fallthru
      _
    // Predicated region
    $region34: #{tpu_custom_call.1} parent=1 // pred_check
      _
    $region35: #{tpu_custom_call.1} parent=1 // pred_check_branch
      %80 = sbr.rel (0) target = $region37
    $region36: #{tpu_custom_call.1} parent=1 // pred_region
      %s82 = ssub.s32 2048, 2048
      %83 = vsyncadd [#allocation9], %s82
      %s84 = sshll.u32 [#allocation10], 4
      %s85 = int_to_ptr.vmem [resolvable:$true] %s84
      %90 = dma.hbm_to_vmem [thread:$0]  %s8, 2048, %s85, [#allocation9], 128, 128, 8
    $region37: #{tpu_custom_call.1} parent=1 // pred_fallthru
      _
    // Predicated region
    $region38: #{tpu_custom_call.1} parent=1 // pred_check
      _
    $region39: #{tpu_custom_call.1} parent=1 // pred_check_branch
      %92 = sbr.rel (0) target = $region41
    $region40: #{tpu_custom_call.1} parent=1 // pred_region
      _
    $region41: #{tpu_custom_call.1} parent=1 // pred_fallthru
      _
    // Predicated region
    $region42: #{tpu_custom_call.1} parent=1 // pred_check
      _
    $region43: #{tpu_custom_call.1} parent=1 // pred_check_branch
      %94 = sbr.rel (0) target = $region45
    $region44: #{tpu_custom_call.1} parent=1 // pred_region
      %95 = dma.done [#allocation3], 2048
    $region45: #{tpu_custom_call.1} parent=1 // pred_fallthru
      _
    // Predicated region
    $region46: #{tpu_custom_call.1} parent=1 // pred_check
      _
    $region47: #{tpu_custom_call.1} parent=1 // pred_check_branch
      %97 = sbr.rel (0) target = $region49
    $region48: #{tpu_custom_call.1} parent=1 // pred_region
      %98 = dma.done [#allocation6], 2048
    $region49: #{tpu_custom_call.1} parent=1 // pred_fallthru
      _
    // Predicated region
    $region50: #{tpu_custom_call.1} parent=1 // pred_check
      _
    $region51: #{tpu_custom_call.1} parent=1 // pred_check_branch
      %100 = sbr.rel (0) target = $region53
    $region52: #{tpu_custom_call.1} parent=1 // pred_region
      %101 = dma.done [#allocation6], 2048
    $region53: #{tpu_custom_call.1} parent=1 // pred_fallthru
      _
    // Predicated region
    $region54: #{tpu_custom_call.1} parent=1 // pred_check
      _
    $region55: #{tpu_custom_call.1} parent=1 // pred_check_branch
      %103 = sbr.rel (0) target = $region57
    $region56: #{tpu_custom_call.1} parent=1 // pred_region
      %104 = dma.done [#allocation9], 2048
    $region57: #{tpu_custom_call.1} parent=1 // pred_fallthru
      _
    // Predicated region
    $region58: #{tpu_custom_call.1} parent=1 // pred_check
      _
    $region59: #{tpu_custom_call.1} parent=1 // pred_check_branch
      %106 = sbr.rel (0) target = $region61
    $region60: #{tpu_custom_call.1} parent=1 // pred_region
      %107 = dma.done [#allocation9], 2048
    $region61: #{tpu_custom_call.1} parent=1 // pred_fallthru
      _
    %v108 = vld [vmem:[#allocation2] sm:$0xff]
    %v109 = vld [vmem:[#allocation2 + $0x8] sm:$0xff]
    %v110 = vld [vmem:[#allocation2 + $0x10] sm:$0xff]
    %v111 = vld [vmem:[#allocation2 + $0x18] sm:$0xff]
    %v112 = vld [vmem:[#allocation2 + $0x20] sm:$0xff]
    %v113 = vld [vmem:[#allocation2 + $0x28] sm:$0xff]
    %v114 = vld [vmem:[#allocation2 + $0x30] sm:$0xff]
    %v115 = vld [vmem:[#allocation2 + $0x38] sm:$0xff]
    %v116 = vld [vmem:[#allocation2 + $0x40] sm:$0xff]
    %v117 = vld [vmem:[#allocation2 + $0x48] sm:$0xff]
    %v118 = vld [vmem:[#allocation2 + $0x50] sm:$0xff]
    %v119 = vld [vmem:[#allocation2 + $0x58] sm:$0xff]
    %v120 = vld [vmem:[#allocation2 + $0x60] sm:$0xff]
    %v121 = vld [vmem:[#allocation2 + $0x68] sm:$0xff]
    %v122 = vld [vmem:[#allocation2 + $0x70] sm:$0xff]
    %v123 = vld [vmem:[#allocation2 + $0x78] sm:$0xff]
    %vm124 = vcmp.ne.f32.partialorder %v108, %v108
    %vm125 = vcmp.ne.f32.partialorder %v109, %v109
    %vm126 = vcmp.ne.f32.partialorder %v110, %v110
    %vm127 = vcmp.ne.f32.partialorder %v111, %v111
    %vm128 = vcmp.ne.f32.partialorder %v112, %v112
    %vm129 = vcmp.ne.f32.partialorder %v113, %v113
    %vm130 = vcmp.ne.f32.partialorder %v114, %v114
    %vm131 = vcmp.ne.f32.partialorder %v115, %v115
    %vm132 = vcmp.ne.f32.partialorder %v116, %v116
    %vm133 = vcmp.ne.f32.partialorder %v117, %v117
    %vm134 = vcmp.ne.f32.partialorder %v118, %v118
    %vm135 = vcmp.ne.f32.partialorder %v119, %v119
    %vm136 = vcmp.ne.f32.partialorder %v120, %v120
    %vm137 = vcmp.ne.f32.partialorder %v121, %v121
    %vm138 = vcmp.ne.f32.partialorder %v122, %v122
    %vm139 = vcmp.ne.f32.partialorder %v123, %v123
    %v140 = vsel %vm124, 0.0, %v108
    %v141 = vsel %vm125, 0.0, %v109
    %v142 = vsel %vm126, 0.0, %v110
    %v143 = vsel %vm127, 0.0, %v111
    %v144 = vsel %vm128, 0.0, %v112
    %v145 = vsel %vm129, 0.0, %v113
    %v146 = vsel %vm130, 0.0, %v114
    %v147 = vsel %vm131, 0.0, %v115
    %v148 = vsel %vm132, 0.0, %v116
    %v149 = vsel %vm133, 0.0, %v117
    %v150 = vsel %vm134, 0.0, %v118
    %v151 = vsel %vm135, 0.0, %v119
    %v152 = vsel %vm136, 0.0, %v120
    %v153 = vsel %vm137, 0.0, %v121
    %v154 = vsel %vm138, 0.0, %v122
    %v155 = vsel %vm139, 0.0, %v123
    %v156 = vmax.f32 %v140, -3.4028235e+38
    %v157 = vmax.f32 %v141, -3.4028235e+38
    %v158 = vmax.f32 %v142, -3.4028235e+38
    %v159 = vmax.f32 %v143, -3.4028235e+38
    %v160 = vmax.f32 %v144, -3.4028235e+38
    %v161 = vmax.f32 %v145, -3.4028235e+38
    %v162 = vmax.f32 %v146, -3.4028235e+38
    %v163 = vmax.f32 %v147, -3.4028235e+38
    %v164 = vmax.f32 %v148, -3.4028235e+38
    %v165 = vmax.f32 %v149, -3.4028235e+38
    %v166 = vmax.f32 %v150, -3.4028235e+38
    %v167 = vmax.f32 %v151, -3.4028235e+38
    %v168 = vmax.f32 %v152, -3.4028235e+38
    %v169 = vmax.f32 %v153, -3.4028235e+38
    %v170 = vmax.f32 %v154, -3.4028235e+38
    %v171 = vmax.f32 %v155, -3.4028235e+38
    %v172 = vmin.f32 %v156, 3.4028235e+38
    %v173 = vmin.f32 %v157, 3.4028235e+38
    %v174 = vmin.f32 %v158, 3.4028235e+38
    %v175 = vmin.f32 %v159, 3.4028235e+38
    %v176 = vmin.f32 %v160, 3.4028235e+38
    %v177 = vmin.f32 %v161, 3.4028235e+38
    %v178 = vmin.f32 %v162, 3.4028235e+38
    %v179 = vmin.f32 %v163, 3.4028235e+38
    %v180 = vmin.f32 %v164, 3.4028235e+38
    %v181 = vmin.f32 %v165, 3.4028235e+38
    %v182 = vmin.f32 %v166, 3.4028235e+38
    %v183 = vmin.f32 %v167, 3.4028235e+38
    %v184 = vmin.f32 %v168, 3.4028235e+38
    %v185 = vmin.f32 %v169, 3.4028235e+38
    %v186 = vmin.f32 %v170, 3.4028235e+38
    %v187 = vmin.f32 %v171, 3.4028235e+38
    %v188 = vld [vmem:[#allocation5] sm:$0xff]
    %v189 = vld [vmem:[#allocation5 + $0x8] sm:$0xff]
    %v190 = vld [vmem:[#allocation5 + $0x10] sm:$0xff]
    %v191 = vld [vmem:[#allocation5 + $0x18] sm:$0xff]
    %v192 = vld [vmem:[#allocation5 + $0x20] sm:$0xff]
    %v193 = vld [vmem:[#allocation5 + $0x28] sm:$0xff]
    %v194 = vld [vmem:[#allocation5 + $0x30] sm:$0xff]
    %v195 = vld [vmem:[#allocation5 + $0x38] sm:$0xff]
    %v196 = vld [vmem:[#allocation5 + $0x40] sm:$0xff]
    %v197 = vld [vmem:[#allocation5 + $0x48] sm:$0xff]
    %v198 = vld [vmem:[#allocation5 + $0x50] sm:$0xff]
    %v199 = vld [vmem:[#allocation5 + $0x58] sm:$0xff]
    %v200 = vld [vmem:[#allocation5 + $0x60] sm:$0xff]
    %v201 = vld [vmem:[#allocation5 + $0x68] sm:$0xff]
    %v202 = vld [vmem:[#allocation5 + $0x70] sm:$0xff]
    %v203 = vld [vmem:[#allocation5 + $0x78] sm:$0xff]
    %v204 = vld [vmem:[%s2] sm:$0x1]
    %v206 = vlaneseq
    %v207 = vshrl.u32 %v206, 7
    %v208 = vsub.s32 0, %v207
    %v209 = vrot.slane %v204, %v208
    %211 = vmatprep.subr.mxu0 0.0
    %212 = vmatpush1.msra.mxu0 %v188
    %213 = vmatprep.subr.mxu0 0.0
    %214 = vmatpush1.msra.mxu0 %v189
    %215 = vmatprep.subr.mxu0 0.0
    %216 = vmatpush1.msra.mxu0 %v190
    %217 = vmatprep.subr.mxu0 0.0
    %218 = vmatpush1.msra.mxu0 %v191
    %219 = vmatprep.subr.mxu0 0.0
    %220 = vmatpush1.msra.mxu0 %v192
    %221 = vmatprep.subr.mxu0 0.0
    %222 = vmatpush1.msra.mxu0 %v193
    %223 = vmatprep.subr.mxu0 0.0
    %224 = vmatpush1.msra.mxu0 %v194
    %225 = vmatprep.subr.mxu0 0.0
    %226 = vmatpush1.msra.mxu0 %v195
    %227 = vmatprep.subr.mxu0 0.0
    %228 = vmatpush1.msra.mxu0 %v196
    %229 = vmatprep.subr.mxu0 0.0
    %230 = vmatpush1.msra.mxu0 %v197
    %231 = vmatprep.subr.mxu0 0.0
    %232 = vmatpush1.msra.mxu0 %v198
    %233 = vmatprep.subr.mxu0 0.0
    %234 = vmatpush1.msra.mxu0 %v199
    %235 = vmatprep.subr.mxu0 0.0
    %236 = vmatpush1.msra.mxu0 %v200
    %237 = vmatprep.subr.mxu0 0.0
    %238 = vmatpush1.msra.mxu0 %v201
    %239 = vmatprep.subr.mxu0 0.0
    %240 = vmatpush1.msra.mxu0 %v202
    %241 = vmatprep.subr.mxu0 0.0
    %242 = vmatpush1.msra.mxu0 %v203
    %243 = vmatprep.subr.mxu0 0.0
    %244 = vmatpush1.msra.mxu0 0.0
    %245 = vmatprep.subr.mxu0 0.0
    %246 = vmatpush1.msra.mxu0 0.0
    %247 = vmatprep.subr.mxu0 0.0
    %248 = vmatpush1.msra.mxu0 0.0
    %249 = vmatprep.subr.mxu0 0.0
    %250 = vmatpush1.msra.mxu0 0.0
    %251 = vmatprep.subr.mxu0 0.0
    %252 = vmatpush1.msra.mxu0 0.0
    %253 = vmatprep.subr.mxu0 0.0
    %254 = vmatpush1.msra.mxu0 0.0
    %255 = vmatprep.subr.mxu0 0.0
    %256 = vmatpush1.msra.mxu0 0.0
    %257 = vmatprep.subr.mxu0 0.0
    %258 = vmatpush1.msra.mxu0 0.0
    %259 = vmatprep.subr.mxu0 0.0
    %260 = vmatpush1.msra.mxu0 0.0
    %261 = vmatprep.subr.mxu0 0.0
    %262 = vmatpush1.msra.mxu0 0.0
    %263 = vmatprep.subr.mxu0 0.0
    %264 = vmatpush1.msra.mxu0 0.0
    %265 = vmatprep.subr.mxu0 0.0
    %266 = vmatpush1.msra.mxu0 0.0
    %267 = vmatprep.subr.mxu0 0.0
    %268 = vmatpush1.msra.mxu0 0.0
    %269 = vmatprep.subr.mxu0 0.0
    %270 = vmatpush1.msra.mxu0 0.0
    %271 = vmatprep.subr.mxu0 0.0
    %272 = vmatpush1.msra.mxu0 0.0
    %273 = vmatprep.subr.mxu0 0.0
    %274 = vmatpush1.msra.mxu0 0.0
    %275 = vmatprep.mubr.f32.mxu0 0.0
    %276 = vmatmul.mubr.f32.gmra.mrb[0].mxu0 %v172
    %v277 = vpop.f32.mrb[0].mxu0
    %v278 = vadd.f32 %v209, %v277
    %v279 = vpop.f32.mrb[0].mxu0
    %280 = vmatprep.mubr.f32.mxu0 0.0
    %281 = vmatmul.mubr.f32.gmra.mrb[0].mxu0 %v173
    %v282 = vpop.f32.mrb[0].mxu0
    %v283 = vadd.f32 %v209, %v282
    %v284 = vpop.f32.mrb[0].mxu0
    %285 = vmatprep.mubr.f32.mxu0 0.0
    %286 = vmatmul.mubr.f32.gmra.mrb[0].mxu0 %v174
    %v287 = vpop.f32.mrb[0].mxu0
    %v288 = vadd.f32 %v209, %v287
    %v289 = vpop.f32.mrb[0].mxu0
    %290 = vmatprep.mubr.f32.mxu0 0.0
    %291 = vmatmul.mubr.f32.gmra.mrb[0].mxu0 %v175
    %v292 = vpop.f32.mrb[0].mxu0
    %v293 = vadd.f32 %v209, %v292
    %v294 = vpop.f32.mrb[0].mxu0
    %295 = vmatprep.mubr.f32.mxu0 0.0
    %296 = vmatmul.mubr.f32.gmra.mrb[0].mxu0 %v176
    %v297 = vpop.f32.mrb[0].mxu0
    %v298 = vadd.f32 %v209, %v297
    %v299 = vpop.f32.mrb[0].mxu0
    %300 = vmatprep.mubr.f32.mxu0 0.0
    %301 = vmatmul.mubr.f32.gmra.mrb[0].mxu0 %v177
    %v302 = vpop.f32.mrb[0].mxu0
    %v303 = vadd.f32 %v209, %v302
    %v304 = vpop.f32.mrb[0].mxu0
    %305 = vmatprep.mubr.f32.mxu0 0.0
    %306 = vmatmul.mubr.f32.gmra.mrb[0].mxu0 %v178
    %v307 = vpop.f32.mrb[0].mxu0
    %v308 = vadd.f32 %v209, %v307
    %v309 = vpop.f32.mrb[0].mxu0
    %310 = vmatprep.mubr.f32.mxu0 0.0
    %311 = vmatmul.mubr.f32.gmra.mrb[0].mxu0 %v179
    %v312 = vpop.f32.mrb[0].mxu0
    %v313 = vadd.f32 %v209, %v312
    %v314 = vpop.f32.mrb[0].mxu0
    %315 = vmatprep.mubr.f32.mxu0 0.0
    %316 = vmatmul.mubr.f32.gmra.mrb[0].mxu0 %v180
    %v317 = vpop.f32.mrb[0].mxu0
    %v318 = vadd.f32 %v209, %v317
    %v319 = vpop.f32.mrb[0].mxu0
    %320 = vmatprep.mubr.f32.mxu0 0.0
    %321 = vmatmul.mubr.f32.gmra.mrb[0].mxu0 %v181
    %v322 = vpop.f32.mrb[0].mxu0
    %v323 = vadd.f32 %v209, %v322
    %v324 = vpop.f32.mrb[0].mxu0
    %325 = vmatprep.mubr.f32.mxu0 0.0
    %326 = vmatmul.mubr.f32.gmra.mrb[0].mxu0 %v182
    %v327 = vpop.f32.mrb[0].mxu0
    %v328 = vadd.f32 %v209, %v327
    %v329 = vpop.f32.mrb[0].mxu0
    %330 = vmatprep.mubr.f32.mxu0 0.0
    %331 = vmatmul.mubr.f32.gmra.mrb[0].mxu0 %v183
    %v332 = vpop.f32.mrb[0].mxu0
    %v333 = vadd.f32 %v209, %v332
    %v334 = vpop.f32.mrb[0].mxu0
    %335 = vmatprep.mubr.f32.mxu0 0.0
    %336 = vmatmul.mubr.f32.gmra.mrb[0].mxu0 %v184
    %v337 = vpop.f32.mrb[0].mxu0
    %v338 = vadd.f32 %v209, %v337
    %v339 = vpop.f32.mrb[0].mxu0
    %340 = vmatprep.mubr.f32.mxu0 0.0
    %341 = vmatmul.mubr.f32.gmra.mrb[0].mxu0 %v185
    %v342 = vpop.f32.mrb[0].mxu0
    %v343 = vadd.f32 %v209, %v342
    %v344 = vpop.f32.mrb[0].mxu0
    %345 = vmatprep.mubr.f32.mxu0 0.0
    %346 = vmatmul.mubr.f32.gmra.mrb[0].mxu0 %v186
    %v347 = vpop.f32.mrb[0].mxu0
    %v348 = vadd.f32 %v209, %v347
    %v349 = vpop.f32.mrb[0].mxu0
    %350 = vmatprep.mubr.f32.mxu0 0.0
    %351 = vmatmul.mubr.f32.gmra.mrb[0].mxu0 %v187
    %v352 = vpop.f32.mrb[0].mxu0
    %v353 = vadd.f32 %v209, %v352
    %v354 = vpop.f32.mrb[0].mxu0
    %355 = vdwg.mxu0
    %vm356 = vcmp.ge.f32.partialorder %v278, 0.0
    %vm357 = vcmp.ge.f32.partialorder %v283, 0.0
    %vm358 = vcmp.ge.f32.partialorder %v288, 0.0
    %vm359 = vcmp.ge.f32.partialorder %v293, 0.0
    %vm360 = vcmp.ge.f32.partialorder %v298, 0.0
    %vm361 = vcmp.ge.f32.partialorder %v303, 0.0
    %vm362 = vcmp.ge.f32.partialorder %v308, 0.0
    %vm363 = vcmp.ge.f32.partialorder %v313, 0.0
    %vm364 = vcmp.ge.f32.partialorder %v318, 0.0
    %vm365 = vcmp.ge.f32.partialorder %v323, 0.0
    %vm366 = vcmp.ge.f32.partialorder %v328, 0.0
    %vm367 = vcmp.ge.f32.partialorder %v333, 0.0
    %vm368 = vcmp.ge.f32.partialorder %v338, 0.0
    %vm369 = vcmp.ge.f32.partialorder %v343, 0.0
    %vm370 = vcmp.ge.f32.partialorder %v348, 0.0
    %vm371 = vcmp.ge.f32.partialorder %v353, 0.0
    %v372 = vmul.f32 %v278, 0.2
    %v373 = vmul.f32 %v283, 0.2
    %v374 = vmul.f32 %v288, 0.2
    %v375 = vmul.f32 %v293, 0.2
    %v376 = vmul.f32 %v298, 0.2
    %v377 = vmul.f32 %v303, 0.2
    %v378 = vmul.f32 %v308, 0.2
    %v379 = vmul.f32 %v313, 0.2
    %v380 = vmul.f32 %v318, 0.2
    %v381 = vmul.f32 %v323, 0.2
    %v382 = vmul.f32 %v328, 0.2
    %v383 = vmul.f32 %v333, 0.2
    %v384 = vmul.f32 %v338, 0.2
    %v385 = vmul.f32 %v343, 0.2
    %v386 = vmul.f32 %v348, 0.2
    %v387 = vmul.f32 %v353, 0.2
    %v388 = vsel %vm356, %v278, %v372
    %v389 = vsel %vm357, %v283, %v373
    %v390 = vsel %vm358, %v288, %v374
    %v391 = vsel %vm359, %v293, %v375
    %v392 = vsel %vm360, %v298, %v376
    %v393 = vsel %vm361, %v303, %v377
    %v394 = vsel %vm362, %v308, %v378
    %v395 = vsel %vm363, %v313, %v379
    %v396 = vsel %vm364, %v318, %v380
    %v397 = vsel %vm365, %v323, %v381
    %v398 = vsel %vm366, %v328, %v382
    %v399 = vsel %vm367, %v333, %v383
    %v400 = vsel %vm368, %v338, %v384
    %v401 = vsel %vm369, %v343, %v385
    %v402 = vsel %vm370, %v348, %v386
    %v403 = vsel %vm371, %v353, %v387
    %v404 = vld [vmem:[%s3] sm:$0x1]
    %v406 = vlaneseq
    %v407 = vshrl.u32 %v406, 7
    %v408 = vsub.s32 0, %v407
    %v409 = vrot.slane %v404, %v408
    %v411 = vmul.f32 %v388, %v409
    %v412 = vmul.f32 %v389, %v409
    %v413 = vmul.f32 %v390, %v409
    %v414 = vmul.f32 %v391, %v409
    %v415 = vmul.f32 %v392, %v409
    %v416 = vmul.f32 %v393, %v409
    %v417 = vmul.f32 %v394, %v409
    %v418 = vmul.f32 %v395, %v409
    %v419 = vmul.f32 %v396, %v409
    %v420 = vmul.f32 %v397, %v409
    %v421 = vmul.f32 %v398, %v409
    %v422 = vmul.f32 %v399, %v409
    %v423 = vmul.f32 %v400, %v409
    %v424 = vmul.f32 %v401, %v409
    %v425 = vmul.f32 %v402, %v409
    %v426 = vmul.f32 %v403, %v409
    %v427 = vld [vmem:[%s4] sm:$0x1]
    %v429 = vlaneseq
    %v430 = vshrl.u32 %v429, 7
    %v431 = vsub.s32 0, %v430
    %v432 = vrot.slane %v427, %v431
    %v434 = vadd.f32 %v411, %v432
    %v435 = vadd.f32 %v412, %v432
    %v436 = vadd.f32 %v413, %v432
    %v437 = vadd.f32 %v414, %v432
    %v438 = vadd.f32 %v415, %v432
    %v439 = vadd.f32 %v416, %v432
    %v440 = vadd.f32 %v417, %v432
    %v441 = vadd.f32 %v418, %v432
    %v442 = vadd.f32 %v419, %v432
    %v443 = vadd.f32 %v420, %v432
    %v444 = vadd.f32 %v421, %v432
    %v445 = vadd.f32 %v422, %v432
    %v446 = vadd.f32 %v423, %v432
    %v447 = vadd.f32 %v424, %v432
    %v448 = vadd.f32 %v425, %v432
    %v449 = vadd.f32 %v426, %v432
    %v450 = vld [vmem:[#allocation7] sm:$0xff]
    %v451 = vld [vmem:[#allocation7 + $0x8] sm:$0xff]
    %v452 = vld [vmem:[#allocation7 + $0x10] sm:$0xff]
    %v453 = vld [vmem:[#allocation7 + $0x18] sm:$0xff]
    %v454 = vld [vmem:[#allocation7 + $0x20] sm:$0xff]
    %v455 = vld [vmem:[#allocation7 + $0x28] sm:$0xff]
    %v456 = vld [vmem:[#allocation7 + $0x30] sm:$0xff]
    %v457 = vld [vmem:[#allocation7 + $0x38] sm:$0xff]
    %v458 = vld [vmem:[#allocation7 + $0x40] sm:$0xff]
    %v459 = vld [vmem:[#allocation7 + $0x48] sm:$0xff]
    %v460 = vld [vmem:[#allocation7 + $0x50] sm:$0xff]
    %v461 = vld [vmem:[#allocation7 + $0x58] sm:$0xff]
    %v462 = vld [vmem:[#allocation7 + $0x60] sm:$0xff]
    %v463 = vld [vmem:[#allocation7 + $0x68] sm:$0xff]
    %v464 = vld [vmem:[#allocation7 + $0x70] sm:$0xff]
    %v465 = vld [vmem:[#allocation7 + $0x78] sm:$0xff]
    %466 = vmatprep.subr.mxu0 0.0
    %467 = vmatpush1.msra.mxu0 %v450
    %468 = vmatprep.subr.mxu0 0.0
    %469 = vmatpush1.msra.mxu0 %v451
    %470 = vmatprep.subr.mxu0 0.0
    %471 = vmatpush1.msra.mxu0 %v452
    %472 = vmatprep.subr.mxu0 0.0
    %473 = vmatpush1.msra.mxu0 %v453
    %474 = vmatprep.subr.mxu0 0.0
    %475 = vmatpush1.msra.mxu0 %v454
    %476 = vmatprep.subr.mxu0 0.0
    %477 = vmatpush1.msra.mxu0 %v455
    %478 = vmatprep.subr.mxu0 0.0
    %479 = vmatpush1.msra.mxu0 %v456
    %480 = vmatprep.subr.mxu0 0.0
    %481 = vmatpush1.msra.mxu0 %v457
    %482 = vmatprep.subr.mxu0 0.0
    %483 = vmatpush1.msra.mxu0 %v458
    %484 = vmatprep.subr.mxu0 0.0
    %485 = vmatpush1.msra.mxu0 %v459
    %486 = vmatprep.subr.mxu0 0.0
    %487 = vmatpush1.msra.mxu0 %v460
    %488 = vmatprep.subr.mxu0 0.0
    %489 = vmatpush1.msra.mxu0 %v461
    %490 = vmatprep.subr.mxu0 0.0
    %491 = vmatpush1.msra.mxu0 %v462
    %492 = vmatprep.subr.mxu0 0.0
    %493 = vmatpush1.msra.mxu0 %v463
    %494 = vmatprep.subr.mxu0 0.0
    %495 = vmatpush1.msra.mxu0 %v464
    %496 = vmatprep.subr.mxu0 0.0
    %497 = vmatpush1.msra.mxu0 %v465
    %498 = vmatprep.subr.mxu0 0.0
    %499 = vmatpush1.msra.mxu0 0.0
    %500 = vmatprep.subr.mxu0 0.0
    %501 = vmatpush1.msra.mxu0 0.0
    %502 = vmatprep.subr.mxu0 0.0
    %503 = vmatpush1.msra.mxu0 0.0
    %504 = vmatprep.subr.mxu0 0.0
    %505 = vmatpush1.msra.mxu0 0.0
    %506 = vmatprep.subr.mxu0 0.0
    %507 = vmatpush1.msra.mxu0 0.0
    %508 = vmatprep.subr.mxu0 0.0
    %509 = vmatpush1.msra.mxu0 0.0
    %510 = vmatprep.subr.mxu0 0.0
    %511 = vmatpush1.msra.mxu0 0.0
    %512 = vmatprep.subr.mxu0 0.0
    %513 = vmatpush1.msra.mxu0 0.0
    %514 = vmatprep.subr.mxu0 0.0
    %515 = vmatpush1.msra.mxu0 0.0
    %516 = vmatprep.subr.mxu0 0.0
    %517 = vmatpush1.msra.mxu0 0.0
    %518 = vmatprep.subr.mxu0 0.0
    %519 = vmatpush1.msra.mxu0 0.0
    %520 = vmatprep.subr.mxu0 0.0
    %521 = vmatpush1.msra.mxu0 0.0
    %522 = vmatprep.subr.mxu0 0.0
    %523 = vmatpush1.msra.mxu0 0.0
    %524 = vmatprep.subr.mxu0 0.0
    %525 = vmatpush1.msra.mxu0 0.0
    %526 = vmatprep.subr.mxu0 0.0
    %527 = vmatpush1.msra.mxu0 0.0
    %528 = vmatprep.subr.mxu0 0.0
    %529 = vmatpush1.msra.mxu0 0.0
    %530 = vmatprep.mubr.f32.mxu0 0.0
    %531 = vmatmul.mubr.f32.gmra.mrb[0].mxu0 %v434
    %v532 = vpop.f32.mrb[0].mxu0
    %v533 = vadd.f32 0.0, %v532
    %v534 = vpop.f32.mrb[0].mxu0
    %535 = vmatprep.mubr.f32.mxu0 0.0
    %536 = vmatmul.mubr.f32.gmra.mrb[0].mxu0 %v435
    %v537 = vpop.f32.mrb[0].mxu0
    %v538 = vadd.f32 0.0, %v537
    %v539 = vpop.f32.mrb[0].mxu0
    %540 = vmatprep.mubr.f32.mxu0 0.0
    %541 = vmatmul.mubr.f32.gmra.mrb[0].mxu0 %v436
    %v542 = vpop.f32.mrb[0].mxu0
    %v543 = vadd.f32 0.0, %v542
    %v544 = vpop.f32.mrb[0].mxu0
    %545 = vmatprep.mubr.f32.mxu0 0.0
    %546 = vmatmul.mubr.f32.gmra.mrb[0].mxu0 %v437
    %v547 = vpop.f32.mrb[0].mxu0
    %v548 = vadd.f32 0.0, %v547
    %v549 = vpop.f32.mrb[0].mxu0
    %550 = vmatprep.mubr.f32.mxu0 0.0
    %551 = vmatmul.mubr.f32.gmra.mrb[0].mxu0 %v438
    %v552 = vpop.f32.mrb[0].mxu0
    %v553 = vadd.f32 0.0, %v552
    %v554 = vpop.f32.mrb[0].mxu0
    %555 = vmatprep.mubr.f32.mxu0 0.0
    %556 = vmatmul.mubr.f32.gmra.mrb[0].mxu0 %v439
    %v557 = vpop.f32.mrb[0].mxu0
    %v558 = vadd.f32 0.0, %v557
    %v559 = vpop.f32.mrb[0].mxu0
    %560 = vmatprep.mubr.f32.mxu0 0.0
    %561 = vmatmul.mubr.f32.gmra.mrb[0].mxu0 %v440
    %v562 = vpop.f32.mrb[0].mxu0
    %v563 = vadd.f32 0.0, %v562
    %v564 = vpop.f32.mrb[0].mxu0
    %565 = vmatprep.mubr.f32.mxu0 0.0
    %566 = vmatmul.mubr.f32.gmra.mrb[0].mxu0 %v441
    %v567 = vpop.f32.mrb[0].mxu0
    %v568 = vadd.f32 0.0, %v567
    %v569 = vpop.f32.mrb[0].mxu0
    %570 = vmatprep.mubr.f32.mxu0 0.0
    %571 = vmatmul.mubr.f32.gmra.mrb[0].mxu0 %v442
    %v572 = vpop.f32.mrb[0].mxu0
    %v573 = vadd.f32 0.0, %v572
    %v574 = vpop.f32.mrb[0].mxu0
    %575 = vmatprep.mubr.f32.mxu0 0.0
    %576 = vmatmul.mubr.f32.gmra.mrb[0].mxu0 %v443
    %v577 = vpop.f32.mrb[0].mxu0
    %v578 = vadd.f32 0.0, %v577
    %v579 = vpop.f32.mrb[0].mxu0
    %580 = vmatprep.mubr.f32.mxu0 0.0
    %581 = vmatmul.mubr.f32.gmra.mrb[0].mxu0 %v444
    %v582 = vpop.f32.mrb[0].mxu0
    %v583 = vadd.f32 0.0, %v582
    %v584 = vpop.f32.mrb[0].mxu0
    %585 = vmatprep.mubr.f32.mxu0 0.0
    %586 = vmatmul.mubr.f32.gmra.mrb[0].mxu0 %v445
    %v587 = vpop.f32.mrb[0].mxu0
    %v588 = vadd.f32 0.0, %v587
    %v589 = vpop.f32.mrb[0].mxu0
    %590 = vmatprep.mubr.f32.mxu0 0.0
    %591 = vmatmul.mubr.f32.gmra.mrb[0].mxu0 %v446
    %v592 = vpop.f32.mrb[0].mxu0
    %v593 = vadd.f32 0.0, %v592
    %v594 = vpop.f32.mrb[0].mxu0
    %595 = vmatprep.mubr.f32.mxu0 0.0
    %596 = vmatmul.mubr.f32.gmra.mrb[0].mxu0 %v447
    %v597 = vpop.f32.mrb[0].mxu0
    %v598 = vadd.f32 0.0, %v597
    %v599 = vpop.f32.mrb[0].mxu0
    %600 = vmatprep.mubr.f32.mxu0 0.0
    %601 = vmatmul.mubr.f32.gmra.mrb[0].mxu0 %v448
    %v602 = vpop.f32.mrb[0].mxu0
    %v603 = vadd.f32 0.0, %v602
    %v604 = vpop.f32.mrb[0].mxu0
    %605 = vmatprep.mubr.f32.mxu0 0.0
    %606 = vmatmul.mubr.f32.gmra.mrb[0].mxu0 %v449
    %v607 = vpop.f32.mrb[0].mxu0
    %v608 = vadd.f32 0.0, %v607
    %v609 = vpop.f32.mrb[0].mxu0
    %610 = vdwg.mxu0
    %v611 = vpack.c.bf16 %v538, %v533
    %v612 = vpack.c.bf16 %v548, %v543
    %v613 = vpack.c.bf16 %v558, %v553
    %v614 = vpack.c.bf16 %v568, %v563
    %v615 = vpack.c.bf16 %v578, %v573
    %v616 = vpack.c.bf16 %v588, %v583
    %v617 = vpack.c.bf16 %v598, %v593
    %v618 = vpack.c.bf16 %v608, %v603
    %v627 = vunpack.c.l.b16 %v611
    %v628 = vunpack.c.h.b16 %v611
    %v629 = vunpack.c.l.b16 %v612
    %v630 = vunpack.c.h.b16 %v612
    %v631 = vunpack.c.l.b16 %v613
    %v632 = vunpack.c.h.b16 %v613
    %v633 = vunpack.c.l.b16 %v614
    %v634 = vunpack.c.h.b16 %v614
    %v635 = vunpack.c.l.b16 %v615
    %v636 = vunpack.c.h.b16 %v615
    %v637 = vunpack.c.l.b16 %v616
    %v638 = vunpack.c.h.b16 %v616
    %v639 = vunpack.c.l.b16 %v617
    %v640 = vunpack.c.h.b16 %v617
    %v641 = vunpack.c.l.b16 %v618
    %v642 = vunpack.c.h.b16 %v618
    %v643 = vpack.c.b16 %v627, %v627
    %v644 = vpack.c.b16 %v628, %v628
    %v645 = vpack.c.b16 %v629, %v629
    %v646 = vpack.c.b16 %v630, %v630
    %v647 = vpack.c.b16 %v631, %v631
    %v648 = vpack.c.b16 %v632, %v632
    %v649 = vpack.c.b16 %v633, %v633
    %v650 = vpack.c.b16 %v634, %v634
    %v651 = vpack.c.b16 %v635, %v635
    %v652 = vpack.c.b16 %v636, %v636
    %v653 = vpack.c.b16 %v637, %v637
    %v654 = vpack.c.b16 %v638, %v638
    %v655 = vpack.c.b16 %v639, %v639
    %v656 = vpack.c.b16 %v640, %v640
    %v657 = vpack.c.b16 %v641, %v641
    %v658 = vpack.c.b16 %v642, %v642
    %675 = vst [vmem:[#allocation11] sm:$0xf] %v643
    %676 = vst [vmem:[#allocation11 + $0x4] sm:$0xf] %v644
    %677 = vst [vmem:[#allocation11 + $0x8] sm:$0xf] %v645
    %678 = vst [vmem:[#allocation11 + $0xc] sm:$0xf] %v646
    %679 = vst [vmem:[#allocation11 + $0x10] sm:$0xf] %v647
    %680 = vst [vmem:[#allocation11 + $0x14] sm:$0xf] %v648
    %681 = vst [vmem:[#allocation11 + $0x18] sm:$0xf] %v649
    %682 = vst [vmem:[#allocation11 + $0x1c] sm:$0xf] %v650
    %683 = vst [vmem:[#allocation11 + $0x20] sm:$0xf] %v651
    %684 = vst [vmem:[#allocation11 + $0x24] sm:$0xf] %v652
    %685 = vst [vmem:[#allocation11 + $0x28] sm:$0xf] %v653
    %686 = vst [vmem:[#allocation11 + $0x2c] sm:$0xf] %v654
    %687 = vst [vmem:[#allocation11 + $0x30] sm:$0xf] %v655
    %688 = vst [vmem:[#allocation11 + $0x34] sm:$0xf] %v656
    %689 = vst [vmem:[#allocation11 + $0x38] sm:$0xf] %v657
    %690 = vst [vmem:[#allocation11 + $0x3c] sm:$0xf] %v658
    %v691 = vld [vmem:[#allocation8] sm:$0xff]
    %v692 = vld [vmem:[#allocation8 + $0x8] sm:$0xff]
    %v693 = vld [vmem:[#allocation8 + $0x10] sm:$0xff]
    %v694 = vld [vmem:[#allocation8 + $0x18] sm:$0xff]
    %v695 = vld [vmem:[#allocation8 + $0x20] sm:$0xff]
    %v696 = vld [vmem:[#allocation8 + $0x28] sm:$0xff]
    %v697 = vld [vmem:[#allocation8 + $0x30] sm:$0xff]
    %v698 = vld [vmem:[#allocation8 + $0x38] sm:$0xff]
    %v699 = vld [vmem:[#allocation8 + $0x40] sm:$0xff]
    %v700 = vld [vmem:[#allocation8 + $0x48] sm:$0xff]
    %v701 = vld [vmem:[#allocation8 + $0x50] sm:$0xff]
    %v702 = vld [vmem:[#allocation8 + $0x58] sm:$0xff]
    %v703 = vld [vmem:[#allocation8 + $0x60] sm:$0xff]
    %v704 = vld [vmem:[#allocation8 + $0x68] sm:$0xff]
    %v705 = vld [vmem:[#allocation8 + $0x70] sm:$0xff]
    %v706 = vld [vmem:[#allocation8 + $0x78] sm:$0xff]
    %v707 = vld [vmem:[%s7] sm:$0x1]
    %v709 = vlaneseq
    %v710 = vshrl.u32 %v709, 7
    %v711 = vsub.s32 0, %v710
    %v712 = vrot.slane %v707, %v711
    %714 = vmatprep.subr.mxu0 0.0
    %715 = vmatpush1.msra.mxu0 %v691
    %716 = vmatprep.subr.mxu0 0.0
    %717 = vmatpush1.msra.mxu0 %v692
    %718 = vmatprep.subr.mxu0 0.0
    %719 = vmatpush1.msra.mxu0 %v693
    %720 = vmatprep.subr.mxu0 0.0
    %721 = vmatpush1.msra.mxu0 %v694
    %722 = vmatprep.subr.mxu0 0.0
    %723 = vmatpush1.msra.mxu0 %v695
    %724 = vmatprep.subr.mxu0 0.0
    %725 = vmatpush1.msra.mxu0 %v696
    %726 = vmatprep.subr.mxu0 0.0
    %727 = vmatpush1.msra.mxu0 %v697
    %728 = vmatprep.subr.mxu0 0.0
    %729 = vmatpush1.msra.mxu0 %v698
    %730 = vmatprep.subr.mxu0 0.0
    %731 = vmatpush1.msra.mxu0 %v699
    %732 = vmatprep.subr.mxu0 0.0
    %733 = vmatpush1.msra.mxu0 %v700
    %734 = vmatprep.subr.mxu0 0.0
    %735 = vmatpush1.msra.mxu0 %v701
    %736 = vmatprep.subr.mxu0 0.0
    %737 = vmatpush1.msra.mxu0 %v702
    %738 = vmatprep.subr.mxu0 0.0
    %739 = vmatpush1.msra.mxu0 %v703
    %740 = vmatprep.subr.mxu0 0.0
    %741 = vmatpush1.msra.mxu0 %v704
    %742 = vmatprep.subr.mxu0 0.0
    %743 = vmatpush1.msra.mxu0 %v705
    %744 = vmatprep.subr.mxu0 0.0
    %745 = vmatpush1.msra.mxu0 %v706
    %746 = vmatprep.subr.mxu0 0.0
    %747 = vmatpush1.msra.mxu0 0.0
    %748 = vmatprep.subr.mxu0 0.0
    %749 = vmatpush1.msra.mxu0 0.0
    %750 = vmatprep.subr.mxu0 0.0
    %751 = vmatpush1.msra.mxu0 0.0
    %752 = vmatprep.subr.mxu0 0.0
    %753 = vmatpush1.msra.mxu0 0.0
    %754 = vmatprep.subr.mxu0 0.0
    %755 = vmatpush1.msra.mxu0 0.0
    %756 = vmatprep.subr.mxu0 0.0
    %757 = vmatpush1.msra.mxu0 0.0
    %758 = vmatprep.subr.mxu0 0.0
    %759 = vmatpush1.msra.mxu0 0.0
    %760 = vmatprep.subr.mxu0 0.0
    %761 = vmatpush1.msra.mxu0 0.0
    %762 = vmatprep.subr.mxu0 0.0
    %763 = vmatpush1.msra.mxu0 0.0
    %764 = vmatprep.subr.mxu0 0.0
    %765 = vmatpush1.msra.mxu0 0.0
    %766 = vmatprep.subr.mxu0 0.0
    %767 = vmatpush1.msra.mxu0 0.0
    %768 = vmatprep.subr.mxu0 0.0
    %769 = vmatpush1.msra.mxu0 0.0
    %770 = vmatprep.subr.mxu0 0.0
    %771 = vmatpush1.msra.mxu0 0.0
    %772 = vmatprep.subr.mxu0 0.0
    %773 = vmatpush1.msra.mxu0 0.0
    %774 = vmatprep.subr.mxu0 0.0
    %775 = vmatpush1.msra.mxu0 0.0
    %776 = vmatprep.subr.mxu0 0.0
    %777 = vmatpush1.msra.mxu0 0.0
    %778 = vmatprep.mubr.f32.mxu0 0.0
    %779 = vmatmul.mubr.f32.gmra.mrb[0].mxu0 %v434
    %v780 = vpop.f32.mrb[0].mxu0
    %v781 = vadd.f32 %v712, %v780
    %v782 = vpop.f32.mrb[0].mxu0
    %783 = vmatprep.mubr.f32.mxu0 0.0
    %784 = vmatmul.mubr.f32.gmra.mrb[0].mxu0 %v435
    %v785 = vpop.f32.mrb[0].mxu0
    %v786 = vadd.f32 %v712, %v785
    %v787 = vpop.f32.mrb[0].mxu0
    %788 = vmatprep.mubr.f32.mxu0 0.0
    %789 = vmatmul.mubr.f32.gmra.mrb[0].mxu0 %v436
    %v790 = vpop.f32.mrb[0].mxu0
    %v791 = vadd.f32 %v712, %v790
    %v792 = vpop.f32.mrb[0].mxu0
    %793 = vmatprep.mubr.f32.mxu0 0.0
    %794 = vmatmul.mubr.f32.gmra.mrb[0].mxu0 %v437
    %v795 = vpop.f32.mrb[0].mxu0
    %v796 = vadd.f32 %v712, %v795
    %v797 = vpop.f32.mrb[0].mxu0
    %798 = vmatprep.mubr.f32.mxu0 0.0
    %799 = vmatmul.mubr.f32.gmra.mrb[0].mxu0 %v438
    %v800 = vpop.f32.mrb[0].mxu0
    %v801 = vadd.f32 %v712, %v800
    %v802 = vpop.f32.mrb[0].mxu0
    %803 = vmatprep.mubr.f32.mxu0 0.0
    %804 = vmatmul.mubr.f32.gmra.mrb[0].mxu0 %v439
    %v805 = vpop.f32.mrb[0].mxu0
    %v806 = vadd.f32 %v712, %v805
    %v807 = vpop.f32.mrb[0].mxu0
    %808 = vmatprep.mubr.f32.mxu0 0.0
    %809 = vmatmul.mubr.f32.gmra.mrb[0].mxu0 %v440
    %v810 = vpop.f32.mrb[0].mxu0
    %v811 = vadd.f32 %v712, %v810
    %v812 = vpop.f32.mrb[0].mxu0
    %813 = vmatprep.mubr.f32.mxu0 0.0
    %814 = vmatmul.mubr.f32.gmra.mrb[0].mxu0 %v441
    %v815 = vpop.f32.mrb[0].mxu0
    %v816 = vadd.f32 %v712, %v815
    %v817 = vpop.f32.mrb[0].mxu0
    %818 = vmatprep.mubr.f32.mxu0 0.0
    %819 = vmatmul.mubr.f32.gmra.mrb[0].mxu0 %v442
    %v820 = vpop.f32.mrb[0].mxu0
    %v821 = vadd.f32 %v712, %v820
    %v822 = vpop.f32.mrb[0].mxu0
    %823 = vmatprep.mubr.f32.mxu0 0.0
    %824 = vmatmul.mubr.f32.gmra.mrb[0].mxu0 %v443
    %v825 = vpop.f32.mrb[0].mxu0
    %v826 = vadd.f32 %v712, %v825
    %v827 = vpop.f32.mrb[0].mxu0
    %828 = vmatprep.mubr.f32.mxu0 0.0
    %829 = vmatmul.mubr.f32.gmra.mrb[0].mxu0 %v444
    %v830 = vpop.f32.mrb[0].mxu0
    %v831 = vadd.f32 %v712, %v830
    %v832 = vpop.f32.mrb[0].mxu0
    %833 = vmatprep.mubr.f32.mxu0 0.0
    %834 = vmatmul.mubr.f32.gmra.mrb[0].mxu0 %v445
    %v835 = vpop.f32.mrb[0].mxu0
    %v836 = vadd.f32 %v712, %v835
    %v837 = vpop.f32.mrb[0].mxu0
    %838 = vmatprep.mubr.f32.mxu0 0.0
    %839 = vmatmul.mubr.f32.gmra.mrb[0].mxu0 %v446
    %v840 = vpop.f32.mrb[0].mxu0
    %v841 = vadd.f32 %v712, %v840
    %v842 = vpop.f32.mrb[0].mxu0
    %843 = vmatprep.mubr.f32.mxu0 0.0
    %844 = vmatmul.mubr.f32.gmra.mrb[0].mxu0 %v447
    %v845 = vpop.f32.mrb[0].mxu0
    %v846 = vadd.f32 %v712, %v845
    %v847 = vpop.f32.mrb[0].mxu0
    %848 = vmatprep.mubr.f32.mxu0 0.0
    %849 = vmatmul.mubr.f32.gmra.mrb[0].mxu0 %v448
    %v850 = vpop.f32.mrb[0].mxu0
    %v851 = vadd.f32 %v712, %v850
    %v852 = vpop.f32.mrb[0].mxu0
    %853 = vmatprep.mubr.f32.mxu0 0.0
    %854 = vmatmul.mubr.f32.gmra.mrb[0].mxu0 %v449
    %v855 = vpop.f32.mrb[0].mxu0
    %v856 = vadd.f32 %v712, %v855
    %v857 = vpop.f32.mrb[0].mxu0
    %858 = vdwg.mxu0
    %v859 = vpack.c.bf16 %v786, %v781
    %v860 = vpack.c.bf16 %v796, %v791
    %v861 = vpack.c.bf16 %v806, %v801
    %v862 = vpack.c.bf16 %v816, %v811
    %v863 = vpack.c.bf16 %v826, %v821
    %v864 = vpack.c.bf16 %v836, %v831
    %v865 = vpack.c.bf16 %v846, %v841
    %v866 = vpack.c.bf16 %v856, %v851
    %v875 = vunpack.c.l.b16 %v859
    %v876 = vunpack.c.h.b16 %v859
    %v877 = vunpack.c.l.b16 %v860
    %v878 = vunpack.c.h.b16 %v860
    %v879 = vunpack.c.l.b16 %v861
    %v880 = vunpack.c.h.b16 %v861
    %v881 = vunpack.c.l.b16 %v862
    %v882 = vunpack.c.h.b16 %v862
    %v883 = vunpack.c.l.b16 %v863
    %v884 = vunpack.c.h.b16 %v863
    %v885 = vunpack.c.l.b16 %v864
    %v886 = vunpack.c.h.b16 %v864
    %v887 = vunpack.c.l.b16 %v865
    %v888 = vunpack.c.h.b16 %v865
    %v889 = vunpack.c.l.b16 %v866
    %v890 = vunpack.c.h.b16 %v866
    %v891 = vpack.c.b16 %v875, %v875
    %v892 = vpack.c.b16 %v876, %v876
    %v893 = vpack.c.b16 %v877, %v877
    %v894 = vpack.c.b16 %v878, %v878
    %v895 = vpack.c.b16 %v879, %v879
    %v896 = vpack.c.b16 %v880, %v880
    %v897 = vpack.c.b16 %v881, %v881
    %v898 = vpack.c.b16 %v882, %v882
    %v899 = vpack.c.b16 %v883, %v883
    %v900 = vpack.c.b16 %v884, %v884
    %v901 = vpack.c.b16 %v885, %v885
    %v902 = vpack.c.b16 %v886, %v886
    %v903 = vpack.c.b16 %v887, %v887
    %v904 = vpack.c.b16 %v888, %v888
    %v905 = vpack.c.b16 %v889, %v889
    %v906 = vpack.c.b16 %v890, %v890
    %923 = vst [vmem:[#allocation12] sm:$0xf] %v891
    %924 = vst [vmem:[#allocation12 + $0x4] sm:$0xf] %v892
    %925 = vst [vmem:[#allocation12 + $0x8] sm:$0xf] %v893
    %926 = vst [vmem:[#allocation12 + $0xc] sm:$0xf] %v894
    %927 = vst [vmem:[#allocation12 + $0x10] sm:$0xf] %v895
    %928 = vst [vmem:[#allocation12 + $0x14] sm:$0xf] %v896
    %929 = vst [vmem:[#allocation12 + $0x18] sm:$0xf] %v897
    %930 = vst [vmem:[#allocation12 + $0x1c] sm:$0xf] %v898
    %931 = vst [vmem:[#allocation12 + $0x20] sm:$0xf] %v899
    %932 = vst [vmem:[#allocation12 + $0x24] sm:$0xf] %v900
    %933 = vst [vmem:[#allocation12 + $0x28] sm:$0xf] %v901
    %934 = vst [vmem:[#allocation12 + $0x2c] sm:$0xf] %v902
    %935 = vst [vmem:[#allocation12 + $0x30] sm:$0xf] %v903
    %936 = vst [vmem:[#allocation12 + $0x34] sm:$0xf] %v904
    %937 = vst [vmem:[#allocation12 + $0x38] sm:$0xf] %v905
    %938 = vst [vmem:[#allocation12 + $0x3c] sm:$0xf] %v906
    %v939 = vld [vmem:[#allocation10] sm:$0xff]
    %v940 = vld [vmem:[#allocation10 + $0x8] sm:$0xff]
    %v941 = vld [vmem:[#allocation10 + $0x10] sm:$0xff]
    %v942 = vld [vmem:[#allocation10 + $0x18] sm:$0xff]
    %v943 = vld [vmem:[#allocation10 + $0x20] sm:$0xff]
    %v944 = vld [vmem:[#allocation10 + $0x28] sm:$0xff]
    %v945 = vld [vmem:[#allocation10 + $0x30] sm:$0xff]
    %v946 = vld [vmem:[#allocation10 + $0x38] sm:$0xff]
    %v947 = vld [vmem:[#allocation10 + $0x40] sm:$0xff]
    %v948 = vld [vmem:[#allocation10 + $0x48] sm:$0xff]
    %v949 = vld [vmem:[#allocation10 + $0x50] sm:$0xff]
    %v950 = vld [vmem:[#allocation10 + $0x58] sm:$0xff]
    %v951 = vld [vmem:[#allocation10 + $0x60] sm:$0xff]
    %v952 = vld [vmem:[#allocation10 + $0x68] sm:$0xff]
    %v953 = vld [vmem:[#allocation10 + $0x70] sm:$0xff]
    %v954 = vld [vmem:[#allocation10 + $0x78] sm:$0xff]
    %v955 = vld [vmem:[%s9] sm:$0x1]
    %v957 = vlaneseq
    %v958 = vshrl.u32 %v957, 7
    %v959 = vsub.s32 0, %v958
    %v960 = vrot.slane %v955, %v959
    %962 = vmatprep.subr.mxu0 0.0
    %963 = vmatpush1.msra.mxu0 %v939
    %964 = vmatprep.subr.mxu0 0.0
    %965 = vmatpush1.msra.mxu0 %v940
    %966 = vmatprep.subr.mxu0 0.0
    %967 = vmatpush1.msra.mxu0 %v941
    %968 = vmatprep.subr.mxu0 0.0
    %969 = vmatpush1.msra.mxu0 %v942
    %970 = vmatprep.subr.mxu0 0.0
    %971 = vmatpush1.msra.mxu0 %v943
    %972 = vmatprep.subr.mxu0 0.0
    %973 = vmatpush1.msra.mxu0 %v944
    %974 = vmatprep.subr.mxu0 0.0
    %975 = vmatpush1.msra.mxu0 %v945
    %976 = vmatprep.subr.mxu0 0.0
    %977 = vmatpush1.msra.mxu0 %v946
    %978 = vmatprep.subr.mxu0 0.0
    %979 = vmatpush1.msra.mxu0 %v947
    %980 = vmatprep.subr.mxu0 0.0
    %981 = vmatpush1.msra.mxu0 %v948
    %982 = vmatprep.subr.mxu0 0.0
    %983 = vmatpush1.msra.mxu0 %v949
    %984 = vmatprep.subr.mxu0 0.0
    %985 = vmatpush1.msra.mxu0 %v950
    %986 = vmatprep.subr.mxu0 0.0
    %987 = vmatpush1.msra.mxu0 %v951
    %988 = vmatprep.subr.mxu0 0.0
    %989 = vmatpush1.msra.mxu0 %v952
    %990 = vmatprep.subr.mxu0 0.0
    %991 = vmatpush1.msra.mxu0 %v953
    %992 = vmatprep.subr.mxu0 0.0
    %993 = vmatpush1.msra.mxu0 %v954
    %994 = vmatprep.subr.mxu0 0.0
    %995 = vmatpush1.msra.mxu0 0.0
    %996 = vmatprep.subr.mxu0 0.0
    %997 = vmatpush1.msra.mxu0 0.0
    %998 = vmatprep.subr.mxu0 0.0
    %999 = vmatpush1.msra.mxu0 0.0
    %1000 = vmatprep.subr.mxu0 0.0
    %1001 = vmatpush1.msra.mxu0 0.0
    %1002 = vmatprep.subr.mxu0 0.0
    %1003 = vmatpush1.msra.mxu0 0.0
    %1004 = vmatprep.subr.mxu0 0.0
    %1005 = vmatpush1.msra.mxu0 0.0
    %1006 = vmatprep.subr.mxu0 0.0
    %1007 = vmatpush1.msra.mxu0 0.0
    %1008 = vmatprep.subr.mxu0 0.0
    %1009 = vmatpush1.msra.mxu0 0.0
    %1010 = vmatprep.subr.mxu0 0.0
    %1011 = vmatpush1.msra.mxu0 0.0
    %1012 = vmatprep.subr.mxu0 0.0
    %1013 = vmatpush1.msra.mxu0 0.0
    %1014 = vmatprep.subr.mxu0 0.0
    %1015 = vmatpush1.msra.mxu0 0.0
    %1016 = vmatprep.subr.mxu0 0.0
    %1017 = vmatpush1.msra.mxu0 0.0
    %1018 = vmatprep.subr.mxu0 0.0
    %1019 = vmatpush1.msra.mxu0 0.0
    %1020 = vmatprep.subr.mxu0 0.0
    %1021 = vmatpush1.msra.mxu0 0.0
    %1022 = vmatprep.subr.mxu0 0.0
    %1023 = vmatpush1.msra.mxu0 0.0
    %1024 = vmatprep.subr.mxu0 0.0
    %1025 = vmatpush1.msra.mxu0 0.0
    %1026 = vmatprep.mubr.f32.mxu0 0.0
    %1027 = vmatmul.mubr.f32.gmra.mrb[0].mxu0 %v434
    %v1028 = vpop.f32.mrb[0].mxu0
    %v1029 = vadd.f32 %v960, %v1028
    %v1030 = vpop.f32.mrb[0].mxu0
    %1031 = vmatprep.mubr.f32.mxu0 0.0
    %1032 = vmatmul.mubr.f32.gmra.mrb[0].mxu0 %v435
    %v1033 = vpop.f32.mrb[0].mxu0
    %v1034 = vadd.f32 %v960, %v1033
    %v1035 = vpop.f32.mrb[0].mxu0
    %1036 = vmatprep.mubr.f32.mxu0 0.0
    %1037 = vmatmul.mubr.f32.gmra.mrb[0].mxu0 %v436
    %v1038 = vpop.f32.mrb[0].mxu0
    %v1039 = vadd.f32 %v960, %v1038
    %v1040 = vpop.f32.mrb[0].mxu0
    %1041 = vmatprep.mubr.f32.mxu0 0.0
    %1042 = vmatmul.mubr.f32.gmra.mrb[0].mxu0 %v437
    %v1043 = vpop.f32.mrb[0].mxu0
    %v1044 = vadd.f32 %v960, %v1043
    %v1045 = vpop.f32.mrb[0].mxu0
    %1046 = vmatprep.mubr.f32.mxu0 0.0
    %1047 = vmatmul.mubr.f32.gmra.mrb[0].mxu0 %v438
    %v1048 = vpop.f32.mrb[0].mxu0
    %v1049 = vadd.f32 %v960, %v1048
    %v1050 = vpop.f32.mrb[0].mxu0
    %1051 = vmatprep.mubr.f32.mxu0 0.0
    %1052 = vmatmul.mubr.f32.gmra.mrb[0].mxu0 %v439
    %v1053 = vpop.f32.mrb[0].mxu0
    %v1054 = vadd.f32 %v960, %v1053
    %v1055 = vpop.f32.mrb[0].mxu0
    %1056 = vmatprep.mubr.f32.mxu0 0.0
    %1057 = vmatmul.mubr.f32.gmra.mrb[0].mxu0 %v440
    %v1058 = vpop.f32.mrb[0].mxu0
    %v1059 = vadd.f32 %v960, %v1058
    %v1060 = vpop.f32.mrb[0].mxu0
    %1061 = vmatprep.mubr.f32.mxu0 0.0
    %1062 = vmatmul.mubr.f32.gmra.mrb[0].mxu0 %v441
    %v1063 = vpop.f32.mrb[0].mxu0
    %v1064 = vadd.f32 %v960, %v1063
    %v1065 = vpop.f32.mrb[0].mxu0
    %1066 = vmatprep.mubr.f32.mxu0 0.0
    %1067 = vmatmul.mubr.f32.gmra.mrb[0].mxu0 %v442
    %v1068 = vpop.f32.mrb[0].mxu0
    %v1069 = vadd.f32 %v960, %v1068
    %v1070 = vpop.f32.mrb[0].mxu0
    %1071 = vmatprep.mubr.f32.mxu0 0.0
    %1072 = vmatmul.mubr.f32.gmra.mrb[0].mxu0 %v443
    %v1073 = vpop.f32.mrb[0].mxu0
    %v1074 = vadd.f32 %v960, %v1073
    %v1075 = vpop.f32.mrb[0].mxu0
    %1076 = vmatprep.mubr.f32.mxu0 0.0
    %1077 = vmatmul.mubr.f32.gmra.mrb[0].mxu0 %v444
    %v1078 = vpop.f32.mrb[0].mxu0
    %v1079 = vadd.f32 %v960, %v1078
    %v1080 = vpop.f32.mrb[0].mxu0
    %1081 = vmatprep.mubr.f32.mxu0 0.0
    %1082 = vmatmul.mubr.f32.gmra.mrb[0].mxu0 %v445
    %v1083 = vpop.f32.mrb[0].mxu0
    %v1084 = vadd.f32 %v960, %v1083
    %v1085 = vpop.f32.mrb[0].mxu0
    %1086 = vmatprep.mubr.f32.mxu0 0.0
    %1087 = vmatmul.mubr.f32.gmra.mrb[0].mxu0 %v446
    %v1088 = vpop.f32.mrb[0].mxu0
    %v1089 = vadd.f32 %v960, %v1088
    %v1090 = vpop.f32.mrb[0].mxu0
    %1091 = vmatprep.mubr.f32.mxu0 0.0
    %1092 = vmatmul.mubr.f32.gmra.mrb[0].mxu0 %v447
    %v1093 = vpop.f32.mrb[0].mxu0
    %v1094 = vadd.f32 %v960, %v1093
    %v1095 = vpop.f32.mrb[0].mxu0
    %1096 = vmatprep.mubr.f32.mxu0 0.0
    %1097 = vmatmul.mubr.f32.gmra.mrb[0].mxu0 %v448
    %v1098 = vpop.f32.mrb[0].mxu0
    %v1099 = vadd.f32 %v960, %v1098
    %v1100 = vpop.f32.mrb[0].mxu0
    %1101 = vmatprep.mubr.f32.mxu0 0.0
    %1102 = vmatmul.mubr.f32.gmra.mrb[0].mxu0 %v449
    %v1103 = vpop.f32.mrb[0].mxu0
    %v1104 = vadd.f32 %v960, %v1103
    %v1105 = vpop.f32.mrb[0].mxu0
    %1106 = vdwg.mxu0
    %v1107 = vpack.c.bf16 %v1034, %v1029
    %v1108 = vpack.c.bf16 %v1044, %v1039
    %v1109 = vpack.c.bf16 %v1054, %v1049
    %v1110 = vpack.c.bf16 %v1064, %v1059
    %v1111 = vpack.c.bf16 %v1074, %v1069
    %v1112 = vpack.c.bf16 %v1084, %v1079
    %v1113 = vpack.c.bf16 %v1094, %v1089
    %v1114 = vpack.c.bf16 %v1104, %v1099
    %v1123 = vunpack.c.l.b16 %v1107
    %v1124 = vunpack.c.h.b16 %v1107
    %v1125 = vunpack.c.l.b16 %v1108
    %v1126 = vunpack.c.h.b16 %v1108
    %v1127 = vunpack.c.l.b16 %v1109
    %v1128 = vunpack.c.h.b16 %v1109
    %v1129 = vunpack.c.l.b16 %v1110
    %v1130 = vunpack.c.h.b16 %v1110
    %v1131 = vunpack.c.l.b16 %v1111
    %v1132 = vunpack.c.h.b16 %v1111
    %v1133 = vunpack.c.l.b16 %v1112
    %v1134 = vunpack.c.h.b16 %v1112
    %v1135 = vunpack.c.l.b16 %v1113
    %v1136 = vunpack.c.h.b16 %v1113
    %v1137 = vunpack.c.l.b16 %v1114
    %v1138 = vunpack.c.h.b16 %v1114
    %v1139 = vpack.c.b16 %v1123, %v1123
    %v1140 = vpack.c.b16 %v1124, %v1124
    %v1141 = vpack.c.b16 %v1125, %v1125
    %v1142 = vpack.c.b16 %v1126, %v1126
    %v1143 = vpack.c.b16 %v1127, %v1127
    %v1144 = vpack.c.b16 %v1128, %v1128
    %v1145 = vpack.c.b16 %v1129, %v1129
    %v1146 = vpack.c.b16 %v1130, %v1130
    %v1147 = vpack.c.b16 %v1131, %v1131
    %v1148 = vpack.c.b16 %v1132, %v1132
    %v1149 = vpack.c.b16 %v1133, %v1133
    %v1150 = vpack.c.b16 %v1134, %v1134
    %v1151 = vpack.c.b16 %v1135, %v1135
    %v1152 = vpack.c.b16 %v1136, %v1136
    %v1153 = vpack.c.b16 %v1137, %v1137
    %v1154 = vpack.c.b16 %v1138, %v1138
    %1171 = vst [vmem:[#allocation14] sm:$0xf] %v1139
    %1172 = vst [vmem:[#allocation14 + $0x4] sm:$0xf] %v1140
    %1173 = vst [vmem:[#allocation14 + $0x8] sm:$0xf] %v1141
    %1174 = vst [vmem:[#allocation14 + $0xc] sm:$0xf] %v1142
    %1175 = vst [vmem:[#allocation14 + $0x10] sm:$0xf] %v1143
    %1176 = vst [vmem:[#allocation14 + $0x14] sm:$0xf] %v1144
    %1177 = vst [vmem:[#allocation14 + $0x18] sm:$0xf] %v1145
    %1178 = vst [vmem:[#allocation14 + $0x1c] sm:$0xf] %v1146
    %1179 = vst [vmem:[#allocation14 + $0x20] sm:$0xf] %v1147
    %1180 = vst [vmem:[#allocation14 + $0x24] sm:$0xf] %v1148
    %1181 = vst [vmem:[#allocation14 + $0x28] sm:$0xf] %v1149
    %1182 = vst [vmem:[#allocation14 + $0x2c] sm:$0xf] %v1150
    %1183 = vst [vmem:[#allocation14 + $0x30] sm:$0xf] %v1151
    %1184 = vst [vmem:[#allocation14 + $0x34] sm:$0xf] %v1152
    %1185 = vst [vmem:[#allocation14 + $0x38] sm:$0xf] %v1153
    %1186 = vst [vmem:[#allocation14 + $0x3c] sm:$0xf] %v1154
    // Predicated region
    $region62: #{tpu_custom_call.1} parent=1 // pred_check
      _
    $region63: #{tpu_custom_call.1} parent=1 // pred_check_branch
      %1188 = sbr.rel (0) target = $region65
    $region64: #{tpu_custom_call.1} parent=1 // pred_region
      %s1190 = ssub.s32 1024, 1024
      %1191 = vsyncadd [#allocation4], %s1190
      %s1192 = sshll.u32 [#allocation11], 4
      %s1193 = int_to_ptr.vmem [resolvable:$true] %s1192
      %1198 = dma.vmem_to_hbm [thread:$0]  %s1193, 1024, %s10, [#allocation4], 64, 64, 4
    $region65: #{tpu_custom_call.1} parent=1 // pred_fallthru
      _
    // Predicated region
    $region66: #{tpu_custom_call.1} parent=1 // pred_check
      _
    $region67: #{tpu_custom_call.1} parent=1 // pred_check_branch
      %1200 = sbr.rel (0) target = $region69
    $region68: #{tpu_custom_call.1} parent=1 // pred_region
      %s1202 = ssub.s32 1024, 1024
      %1203 = vsyncadd [#allocation13], %s1202
      %s1204 = sshll.u32 [#allocation12], 4
      %s1205 = int_to_ptr.vmem [resolvable:$true] %s1204
      %1210 = dma.vmem_to_hbm [thread:$0]  %s1205, 1024, %s11, [#allocation13], 64, 64, 4
    $region69: #{tpu_custom_call.1} parent=1 // pred_fallthru
      _
    // Predicated region
    $region70: #{tpu_custom_call.1} parent=1 // pred_check
      _
    $region71: #{tpu_custom_call.1} parent=1 // pred_check_branch
      %1212 = sbr.rel (0) target = $region73
    $region72: #{tpu_custom_call.1} parent=1 // pred_region
      %s1214 = ssub.s32 1024, 1024
      %1215 = vsyncadd [#allocation13], %s1214
      %s1216 = sshll.u32 [#allocation14], 4
      %s1217 = int_to_ptr.vmem [resolvable:$true] %s1216
      %1222 = dma.vmem_to_hbm [thread:$0]  %s1217, 1024, %s12, [#allocation13], 64, 64, 4
    $region73: #{tpu_custom_call.1} parent=1 // pred_fallthru
      _
    // Predicated region
    $region74: #{tpu_custom_call.1} parent=1 // pred_check
      _
    $region75: #{tpu_custom_call.1} parent=1 // pred_check_branch
      %1224 = sbr.rel (0) target = $region77
    $region76: #{tpu_custom_call.1} parent=1 // pred_region
      %1225 = dma.done [#allocation4], 1024
    $region77: #{tpu_custom_call.1} parent=1 // pred_fallthru
      _
    // Predicated region
    $region78: #{tpu_custom_call.1} parent=1 // pred_check
      _
    $region79: #{tpu_custom_call.1} parent=1 // pred_check_branch
      %1227 = sbr.rel (0) target = $region81
    $region80: #{tpu_custom_call.1} parent=1 // pred_region
      %1228 = dma.done [#allocation13], 1024
    $region81: #{tpu_custom_call.1} parent=1 // pred_fallthru
      _
    // Predicated region
    $region82: #{tpu_custom_call.1} parent=1 // pred_check
      _
    $region83: #{tpu_custom_call.1} parent=1 // pred_check_branch
      %1230 = sbr.rel (0) target = $region85
    $region84: #{tpu_custom_call.1} parent=1 // pred_region
      %1231 = dma.done [#allocation13], 1024
    $region85: #{tpu_custom_call.1} parent=1 // pred_fallthru
      _
    %1232 = vsyncpa [#allocation3], 1
    %1233 = vsyncpa [#allocation6], 1
    %1234 = vsyncpa [#allocation9], 1
    %1235 = vsyncpa [#allocation4], 1
    %1236 = vsyncpa [#allocation13], 1

</llo_original>
